<compile_context>
chip_gen: v7x
topology: tpu7x:2x2x1
jax: 0.10.0
libtpu: 0.0.40
codegen_flags: <defaults>
</compile_context>

<pallas_src>
import functools

import numpy as np
import jax
import jax.numpy as jnp
from jax import lax
from jax.experimental import pallas as pl
from jax.experimental.pallas import tpu as pltpu


def _round_up(n, m):
    return (n + m - 1) // m * m


# ----------------------------- Pallas kernel ------------------------------ #
def _decoder_rnn_kernel(xrep_ref,    # (T*Bp, D)      interleaved/repeated input
                        p1_ref,      # (R1, 4*H1)     [Wih1; Whh1; b1; Wout_pad; bout_pad]
                        p2_ref,      # (H1+H2+1, 4H2) [Wih2; Whh2; b2]  gates (i,f,o,g)
                        out_ref,     # (T*Bp, F)
                        xproj_ref,   # scratch (T*Bp, 4*H1)
                        h2hist_ref,  # scratch (T*Bp, H2)
                        *, seq_len, batch_pad):
    T = seq_len
    Bp = batch_pad
    D = xrep_ref.shape[1]
    H1 = p1_ref.shape[1] // 4
    H2 = p2_ref.shape[1] // 4
    F = out_ref.shape[1]

    # Static, 8-aligned row offsets inside the packed parameter slabs.
    r_whh1 = D
    r_b1 = D + H1
    r_wout = _round_up(r_b1 + 1, 8)
    r_bout = r_wout + H2
    r_b2 = H1 + H2

    # --- Hoisted layer-1 input projection for ALL timesteps: one MXU pass.
    xproj_ref[...] = (
        jnp.dot(xrep_ref[...], p1_ref[0:D, :], preferred_element_type=jnp.float32)
        + p1_ref[r_b1:r_b1 + 1, :])

    # Hoist the layer-2 bias broadcast out of the unrolled loop.
    b2b = jnp.broadcast_to(p2_ref[r_b2:r_b2 + 1, :], (Bp, 4 * H2))

    def lstm_elem(gates, c, H):
        # Gate layout (i, f, o, g): one contiguous sigmoid slice + one tanh slice.
        sig = jax.nn.sigmoid(gates[:, :3 * H])
        g_g = jnp.tanh(gates[:, 3 * H:])
        i_g = sig[:, :H]
        f_g = sig[:, H:2 * H]
        o_g = sig[:, 2 * H:]
        c_new = f_g * c + i_g * g_g
        h_new = o_g * jnp.tanh(c_new)
        return h_new, c_new

    h1 = jnp.zeros((Bp, H1), jnp.float32)
    c1 = jnp.zeros((Bp, H1), jnp.float32)
    h2 = jnp.zeros((Bp, H2), jnp.float32)
    c2 = jnp.zeros((Bp, H2), jnp.float32)

    # Static unroll over T (small, trace-time constant).  Recurrent weights are
    # read from VMEM at the dot sites (not hoisted into values) to limit vreg
    # pressure across the unroll.
    # NOTE: pltpu.matmul_push_rhs could keep Whh1/W2cat resident in the MXU
    # across all 8 steps; deliberately left on jnp.dot for lowering robustness.
    for t in range(T):
        r0 = t * Bp
        gates1 = xproj_ref[r0:r0 + Bp, :] + jnp.dot(
            h1, p1_ref[r_whh1:r_whh1 + H1, :], preferred_element_type=jnp.float32)
        h1, c1 = lstm_elem(gates1, c1, H1)

        # Fused layer-2 recurrence: single (Bp, H1+H2) @ (H1+H2, 4*H2) dot.
        h12 = jnp.concatenate([h1, h2], axis=-1)
        gates2 = jnp.dot(h12, p2_ref[0:H1 + H2, :],
                         preferred_element_type=jnp.float32) + b2b
        h2, c2 = lstm_elem(gates2, c2, H2)
        h2hist_ref[r0:r0 + Bp, :] = h2

    # --- Deferred output head: single batched matmul + single store.
    y = jnp.dot(h2hist_ref[...], p1_ref[r_wout:r_wout + H2, :],
                preferred_element_type=jnp.float32)
    y = y + p1_ref[r_bout:r_bout + 1, :]
    out_ref[...] = y[:, :F].astype(out_ref.dtype)


# --------------------- One-time parameter preparation ---------------------- #
def prepare_params(params):
    """Layout prep (run ONCE, outside the per-call path).

    - Reorders gate columns (i,f,g,o) -> (i,f,o,g) so sigmoid runs on one
      contiguous slice and tanh on the last.
    - Fuses layer-2 weights: W2cat = [Wih2; Whh2]  (H1+H2, 4*H2).
    - Packs everything into two slabs (p1: 128-wide, p2: 256-wide) so the
      kernel issues only 3 HBM->VMEM DMAs total (x_rep, p1, p2).
    """
    wih1, whh1, b1, wih2, whh2, b2, wout, bout = params
    D, H1, H2 = wih1.shape[0], whh1.shape[0], whh2.shape[0]
    F = wout.shape[1]
    G1, G2 = 4 * H1, 4 * H2
    assert F <= G1, "head packing assumes n_features <= 4*hidden1"

    def reorder(w, H):   # (i, f, g, o) -> (i, f, o, g)
        return jnp.concatenate([w[:, :2 * H], w[:, 3 * H:], w[:, 2 * H:3 * H]], axis=1)

    wih1_k, whh1_k, b1_k = reorder(wih1, H1), reorder(whh1, H1), reorder(b1, H1)
    wih2_k, whh2_k, b2_k = reorder(wih2, H2), reorder(whh2, H2), reorder(b2, H2)

    r_b1 = D + H1
    r_wout = _round_up(r_b1 + 1, 8)          # keep slab slices sublane-aligned
    r_bout = r_wout + H2
    p1 = jnp.zeros((r_bout + 1, G1), jnp.float32)
    p1 = p1.at[0:D].set(wih1_k.astype(jnp.float32))
    p1 = p1.at[D:D + H1].set(whh1_k.astype(jnp.float32))
    p1 = p1.at[r_b1].set(b1_k[0].astype(jnp.float32))
    p1 = p1.at[r_wout:r_wout + H2, :F].set(wout.astype(jnp.float32))
    p1 = p1.at[r_bout, :F].set(bout[0].astype(jnp.float32))

    p2 = jnp.zeros((H1 + H2 + 1, G2), jnp.float32)
    p2 = p2.at[0:H1].set(wih2_k.astype(jnp.float32))
    p2 = p2.at[H1:H1 + H2].set(whh2_k.astype(jnp.float32))
    p2 = p2.at[H1 + H2].set(b2_k[0].astype(jnp.float32))
    return p1, p2


# ------------------------------ Wrapper ------------------------------------ #
@functools.partial(jax.jit, static_argnames=("seq_len", "n_features"))
def decoder_rnn_forward(x, p1, p2, seq_len, n_features):
    """x: (B, input_dim) -> (B, seq_len, n_features). Matches DecoderRNN.forward."""
    B, D = x.shape
    T = seq_len
    Bp = max(8, _round_up(B, 8))              # pad batch to a full sublane group
    H1 = p1.shape[1] // 4
    H2 = p2.shape[1] // 4

    # PyTorch x.repeat(T,1).reshape(B,T,D) quirk as a trace-time-static row
    # permutation: x_tbd[t, b] = x[(b*T + t) % B].  Padded rows (b >= B) select
    # zero rows of x_pad; they produce independent garbage that is sliced off
    # below (never reduce over the padded batch rows).
    x_pad = jnp.zeros((Bp, D), jnp.float32).at[:B].set(x.astype(jnp.float32))
    idx = np.empty((T * Bp,), np.int32)
    for t in range(T):
        for b in range(Bp):
            idx[t * Bp + b] = (b * T + t) % B if b < B else b
    x_rep = x_pad[jnp.asarray(idx)]                       # (T*Bp, D)

    vmem = pl.BlockSpec(memory_space=pltpu.MemorySpace.VMEM)
    kernel = functools.partial(_decoder_rnn_kernel, seq_len=T, batch_pad=Bp)
    out_flat = pl.pallas_call(
        kernel,
        out_shape=jax.ShapeDtypeStruct((T * Bp, n_features), jnp.float32),
        in_specs=[vmem, vmem, vmem],
        out_specs=vmem,
        scratch_shapes=[pltpu.VMEM((T * Bp, 4 * H1), jnp.float32),
                        pltpu.VMEM((T * Bp, H2), jnp.float32)],
    )(x_rep, p1, p2)

    out = out_flat.reshape(T, Bp, n_features)[:, :B, :]   # drop batch padding
    return jnp.transpose(out, (1, 0, 2))                  # (B, T, F)


# --------------------------- Parameter init -------------------------------- #
def init_params(key, input_dim, n_features):
    """Deterministic synthetic parameters, shapes implied by DecoderRNN.__init__.

    Stored transposed as (in_dim, 4*hidden) with PyTorch gate order (i, f, g, o)
    and combined bias b = b_ih + b_hh.
    """
    hidden_dim = 2 * input_dim
    ks = jax.random.split(key, 8)

    def unif(k, shape, bound):
        return jax.random.uniform(k, shape, jnp.float32, -bound, bound)

    k1 = 1.0 / jnp.sqrt(input_dim)
    k2 = 1.0 / jnp.sqrt(hidden_dim)
    # rnn1: LSTM(input_dim -> input_dim)
    wih1 = unif(ks[0], (input_dim, 4 * input_dim), k1)
    whh1 = unif(ks[1], (input_dim, 4 * input_dim), k1)
    b1 = unif(ks[2], (1, 4 * input_dim), k1)
    # rnn2: LSTM(input_dim -> hidden_dim)
    wih2 = unif(ks[3], (input_dim, 4 * hidden_dim), k2)
    whh2 = unif(ks[4], (hidden_dim, 4 * hidden_dim), k2)
    b2 = unif(ks[5], (1, 4 * hidden_dim), k2)
    # output_layer: Linear(hidden_dim -> n_features)
    wout = unif(ks[6], (hidden_dim, n_features), k2)
    bout = unif(ks[7], (1, n_features), k2)
    return (wih1, whh1, b1, wih2, whh2, b2, wout, bout)


# ------------------------- Pure-JAX reference ------------------------------ #
def reference_forward(x, params, seq_len):
    (wih1, whh1, b1, wih2, whh2, b2, wout, bout) = params
    B, D = x.shape
    H1 = whh1.shape[0]
    H2 = whh2.shape[0]
    # Faithfully reproduces PyTorch's x.repeat(seq_len,1).reshape(...) quirk,
    # which interleaves batch elements across timesteps (x_t[b] = x[(b*T + t) % B]).
    x_rep = jnp.tile(x, (seq_len, 1)).reshape(B, seq_len, D)
    xs = jnp.transpose(x_rep, (1, 0, 2))

    def cell(x_t, h, c, wih, whh, b, H):
        g = x_t @ wih + h @ whh + b
        i = jax.nn.sigmoid(g[:, :H])
        f = jax.nn.sigmoid(g[:, H:2 * H])
        gg = jnp.tanh(g[:, 2 * H:3 * H])
        o = jax.nn.sigmoid(g[:, 3 * H:])
        c = f * c + i * gg
        h = o * jnp.tanh(c)
        return h, c

    def scan_fn(carry, x_t):
        h1, c1, h2, c2 = carry
        h1, c1 = cell(x_t, h1, c1, wih1, whh1, b1, H1)
        h2, c2 = cell(h1, h2, c2, wih2, whh2, b2, H2)
        y = h2 @ wout + bout
        return (h1, c1, h2, c2), y

    init = (jnp.zeros((B, H1)), jnp.zeros((B, H1)),
            jnp.zeros((B, H2)), jnp.zeros((B, H2)))
    _, ys = lax.scan(scan_fn, init, xs)
    return jnp.transpose(ys, (1, 0, 2))


# --------------------------------- Main ------------------------------------ #
if __name__ == "__main__":
    seq_len = 8
    input_dim = 32
    n_features = 1
    batch = 2

    key = jax.random.PRNGKey(0)
    params = init_params(key, input_dim, n_features)
    p1, p2 = jax.block_until_ready(prepare_params(params))   # one-time layout prep
    x = jax.random.normal(jax.random.fold_in(key, 99), (batch, input_dim), jnp.float32)

    out = decoder_rnn_forward(x, p1, p2, seq_len, n_features)
    out = jax.block_until_ready(out)

    ref = reference_forward(x, params, seq_len)
    assert out.shape == (batch, seq_len, n_features), out.shape
    assert jnp.allclose(out, ref, atol=1e-5, rtol=1e-5), \
        float(jnp.max(jnp.abs(out - ref)))

    print("KERNEL_OK")
</pallas_src>

<mosaic_0001>
module attributes {stable_mosaic.version = 11 : i64} {
  func.func @_decoder_rnn_kernel(%arg0: memref<64x32xf32, #tpu.memory_space<vmem>>, %arg1: memref<137x128xf32, #tpu.memory_space<vmem>>, %arg2: memref<97x256xf32, #tpu.memory_space<vmem>>, %arg3: memref<64x1xf32, #tpu.memory_space<vmem>>, %arg4: memref<64x128xf32, #tpu.memory_space<vmem>>, %arg5: memref<64x64xf32, #tpu.memory_space<vmem>>) attributes {dimension_semantics = [], scalar_prefetch = 0 : i64, scratch_operands = 2 : i64, tpu.core_type = #tpu.core_type<tc>} {
    %c0 = arith.constant 0 : index
    %c0_0 = arith.constant 0 : index
    %0 = vector.load %arg0[%c0, %c0_0] : memref<64x32xf32, #tpu.memory_space<vmem>>, vector<64x32xf32>
    %c0_1 = arith.constant 0 : index
    %c0_2 = arith.constant 0 : index
    %1 = vector.load %arg1[%c0_1, %c0_2] : memref<137x128xf32, #tpu.memory_space<vmem>>, vector<32x128xf32>
    %cst = arith.constant dense<0.000000e+00> : vector<64x128xf32>
    %2 = tpu.matmul %0, %1, %cst {dimension_numbers = #tpu.dot_dimension_numbers<[1], [0], [0], [1], [0, 0, 1, 1], [], []>} : vector<64x32xf32>, vector<32x128xf32>, vector<64x128xf32> -> vector<64x128xf32>
    %c64 = arith.constant 64 : index
    %c0_3 = arith.constant 0 : index
    %3 = vector.load %arg1[%c64, %c0_3] : memref<137x128xf32, #tpu.memory_space<vmem>>, vector<1x128xf32>
    %4 = vector.broadcast %3 : vector<1x128xf32> to vector<64x128xf32>
    %5 = arith.addf %2, %4 : vector<64x128xf32>
    %c0_4 = arith.constant 0 : index
    %c0_5 = arith.constant 0 : index
    %6 = vector.load %arg4[%c0_4, %c0_5] : memref<64x128xf32, #tpu.memory_space<vmem>>, vector<64x128xf32>
    tpu.vector_store %arg4[%c0_4, %c0_5], %5 {strides = array<i32>} : memref<64x128xf32, #tpu.memory_space<vmem>>, vector<64x128xf32>,
    %c96 = arith.constant 96 : index
    %c0_6 = arith.constant 0 : index
    %7 = vector.load %arg2[%c96, %c0_6] : memref<97x256xf32, #tpu.memory_space<vmem>>, vector<1x256xf32>
    %8 = vector.shape_cast %7 : vector<1x256xf32> to vector<1x256xf32>
    %9 = vector.broadcast %8 : vector<1x256xf32> to vector<8x256xf32>
    %cst_7 = arith.constant 0.000000e+00 : f32
    %10 = vector.broadcast %cst_7 : f32 to vector<8x32xf32>
    %cst_8 = arith.constant 0.000000e+00 : f32
    %11 = vector.broadcast %cst_8 : f32 to vector<8x32xf32>
    %cst_9 = arith.constant 0.000000e+00 : f32
    %12 = vector.broadcast %cst_9 : f32 to vector<8x64xf32>
    %cst_10 = arith.constant 0.000000e+00 : f32
    %13 = vector.broadcast %cst_10 : f32 to vector<8x64xf32>
    %c0_11 = arith.constant 0 : index
    %c0_12 = arith.constant 0 : index
    %14 = vector.load %arg4[%c0_11, %c0_12] : memref<64x128xf32, #tpu.memory_space<vmem>>, vector<8x128xf32>
    %c32 = arith.constant 32 : index
    %c0_13 = arith.constant 0 : index
    %15 = vector.load %arg1[%c32, %c0_13] : memref<137x128xf32, #tpu.memory_space<vmem>>, vector<32x128xf32>
    %cst_14 = arith.constant dense<0.000000e+00> : vector<8x128xf32>
    %16 = tpu.matmul %10, %15, %cst_14 {dimension_numbers = #tpu.dot_dimension_numbers<[1], [0], [0], [1], [0, 0, 1, 1], [], []>} : vector<8x32xf32>, vector<32x128xf32>, vector<8x128xf32> -> vector<8x128xf32>
    %17 = arith.addf %14, %16 : vector<8x128xf32>
    %18 = vector.extract_strided_slice %17 {offsets = [0, 0], sizes = [8, 96], strides = [1, 1]} : vector<8x128xf32> to vector<8x96xf32>
    %19 = arith.negf %18 : vector<8x96xf32>
    %20 = math.exp %19 : vector<8x96xf32>
    %cst_15 = arith.constant 1.000000e+00 : f32
    %21 = vector.broadcast %cst_15 : f32 to vector<8x96xf32>
    %22 = arith.addf %21, %20 : vector<8x96xf32>
    %23 = arith.divf %21, %22 : vector<8x96xf32>
    %24 = vector.extract_strided_slice %17 {offsets = [0, 96], sizes = [8, 32], strides = [1, 1]} : vector<8x128xf32> to vector<8x32xf32>
    %25 = math.tanh %24 : vector<8x32xf32>
    %26 = vector.extract_strided_slice %23 {offsets = [0, 0], sizes = [8, 32], strides = [1, 1]} : vector<8x96xf32> to vector<8x32xf32>
    %27 = vector.extract_strided_slice %23 {offsets = [0, 32], sizes = [8, 32], strides = [1, 1]} : vector<8x96xf32> to vector<8x32xf32>
    %28 = vector.extract_strided_slice %23 {offsets = [0, 64], sizes = [8, 32], strides = [1, 1]} : vector<8x96xf32> to vector<8x32xf32>
    %29 = arith.mulf %27, %11 : vector<8x32xf32>
    %30 = arith.mulf %26, %25 : vector<8x32xf32>
    %31 = arith.addf %29, %30 : vector<8x32xf32>
    %32 = math.tanh %31 : vector<8x32xf32>
    %33 = arith.mulf %28, %32 : vector<8x32xf32>
    %34 = tpu.concatenate %33, %12 in 1 : vector<8x32xf32>, vector<8x64xf32> -> vector<8x96xf32>
    %c0_16 = arith.constant 0 : index
    %c0_17 = arith.constant 0 : index
    %35 = vector.load %arg2[%c0_16, %c0_17] : memref<97x256xf32, #tpu.memory_space<vmem>>, vector<96x256xf32>
    %cst_18 = arith.constant dense<0.000000e+00> : vector<8x256xf32>
    %36 = tpu.matmul %34, %35, %cst_18 {dimension_numbers = #tpu.dot_dimension_numbers<[1], [0], [0], [1], [0, 0, 1, 1], [], []>} : vector<8x96xf32>, vector<96x256xf32>, vector<8x256xf32> -> vector<8x256xf32>
    %37 = arith.addf %36, %9 : vector<8x256xf32>
    %38 = vector.extract_strided_slice %37 {offsets = [0, 0], sizes = [8, 192], strides = [1, 1]} : vector<8x256xf32> to vector<8x192xf32>
    %39 = arith.negf %38 : vector<8x192xf32>
    %40 = math.exp %39 : vector<8x192xf32>
    %cst_19 = arith.constant 1.000000e+00 : f32
    %41 = vector.broadcast %cst_19 : f32 to vector<8x192xf32>
    %42 = arith.addf %41, %40 : vector<8x192xf32>
    %43 = arith.divf %41, %42 : vector<8x192xf32>
    %44 = vector.extract_strided_slice %37 {offsets = [0, 192], sizes = [8, 64], strides = [1, 1]} : vector<8x256xf32> to vector<8x64xf32>
    %45 = math.tanh %44 : vector<8x64xf32>
    %46 = vector.extract_strided_slice %43 {offsets = [0, 0], sizes = [8, 64], strides = [1, 1]} : vector<8x192xf32> to vector<8x64xf32>
    %47 = vector.extract_strided_slice %43 {offsets = [0, 64], sizes = [8, 64], strides = [1, 1]} : vector<8x192xf32> to vector<8x64xf32>
    %48 = vector.extract_strided_slice %43 {offsets = [0, 128], sizes = [8, 64], strides = [1, 1]} : vector<8x192xf32> to vector<8x64xf32>
    %49 = arith.mulf %47, %13 : vector<8x64xf32>
    %50 = arith.mulf %46, %45 : vector<8x64xf32>
    %51 = arith.addf %49, %50 : vector<8x64xf32>
    %52 = math.tanh %51 : vector<8x64xf32>
    %53 = arith.mulf %48, %52 : vector<8x64xf32>
    %c0_20 = arith.constant 0 : index
    %c0_21 = arith.constant 0 : index
    %54 = vector.load %arg5[%c0_20, %c0_21] : memref<64x64xf32, #tpu.memory_space<vmem>>, vector<8x64xf32>
    tpu.vector_store %arg5[%c0_20, %c0_21], %53 {strides = array<i32>} : memref<64x64xf32, #tpu.memory_space<vmem>>, vector<8x64xf32>,
    %c8 = arith.constant 8 : index
    %c0_22 = arith.constant 0 : index
    %55 = vector.load %arg4[%c8, %c0_22] : memref<64x128xf32, #tpu.memory_space<vmem>>, vector<8x128xf32>
    %c32_23 = arith.constant 32 : index
    %c0_24 = arith.constant 0 : index
    %56 = vector.load %arg1[%c32_23, %c0_24] : memref<137x128xf32, #tpu.memory_space<vmem>>, vector<32x128xf32>
    %cst_25 = arith.constant dense<0.000000e+00> : vector<8x128xf32>
    %57 = tpu.matmul %33, %56, %cst_25 {dimension_numbers = #tpu.dot_dimension_numbers<[1], [0], [0], [1], [0, 0, 1, 1], [], []>} : vector<8x32xf32>, vector<32x128xf32>, vector<8x128xf32> -> vector<8x128xf32>
    %58 = arith.addf %55, %57 : vector<8x128xf32>
    %59 = vector.extract_strided_slice %58 {offsets = [0, 0], sizes = [8, 96], strides = [1, 1]} : vector<8x128xf32> to vector<8x96xf32>
    %60 = arith.negf %59 : vector<8x96xf32>
    %61 = math.exp %60 : vector<8x96xf32>
    %cst_26 = arith.constant 1.000000e+00 : f32
    %62 = vector.broadcast %cst_26 : f32 to vector<8x96xf32>
    %63 = arith.addf %62, %61 : vector<8x96xf32>
    %64 = arith.divf %62, %63 : vector<8x96xf32>
    %65 = vector.extract_strided_slice %58 {offsets = [0, 96], sizes = [8, 32], strides = [1, 1]} : vector<8x128xf32> to vector<8x32xf32>
    %66 = math.tanh %65 : vector<8x32xf32>
    %67 = vector.extract_strided_slice %64 {offsets = [0, 0], sizes = [8, 32], strides = [1, 1]} : vector<8x96xf32> to vector<8x32xf32>
    %68 = vector.extract_strided_slice %64 {offsets = [0, 32], sizes = [8, 32], strides = [1, 1]} : vector<8x96xf32> to vector<8x32xf32>
    %69 = vector.extract_strided_slice %64 {offsets = [0, 64], sizes = [8, 32], strides = [1, 1]} : vector<8x96xf32> to vector<8x32xf32>
    %70 = arith.mulf %68, %31 : vector<8x32xf32>
    %71 = arith.mulf %67, %66 : vector<8x32xf32>
    %72 = arith.addf %70, %71 : vector<8x32xf32>
    %73 = math.tanh %72 : vector<8x32xf32>
    %74 = arith.mulf %69, %73 : vector<8x32xf32>
    %75 = tpu.concatenate %74, %53 in 1 : vector<8x32xf32>, vector<8x64xf32> -> vector<8x96xf32>
    %c0_27 = arith.constant 0 : index
    %c0_28 = arith.constant 0 : index
    %76 = vector.load %arg2[%c0_27, %c0_28] : memref<97x256xf32, #tpu.memory_space<vmem>>, vector<96x256xf32>
    %cst_29 = arith.constant dense<0.000000e+00> : vector<8x256xf32>
    %77 = tpu.matmul %75, %76, %cst_29 {dimension_numbers = #tpu.dot_dimension_numbers<[1], [0], [0], [1], [0, 0, 1, 1], [], []>} : vector<8x96xf32>, vector<96x256xf32>, vector<8x256xf32> -> vector<8x256xf32>
    %78 = arith.addf %77, %9 : vector<8x256xf32>
    %79 = vector.extract_strided_slice %78 {offsets = [0, 0], sizes = [8, 192], strides = [1, 1]} : vector<8x256xf32> to vector<8x192xf32>
    %80 = arith.negf %79 : vector<8x192xf32>
    %81 = math.exp %80 : vector<8x192xf32>
    %cst_30 = arith.constant 1.000000e+00 : f32
    %82 = vector.broadcast %cst_30 : f32 to vector<8x192xf32>
    %83 = arith.addf %82, %81 : vector<8x192xf32>
    %84 = arith.divf %82, %83 : vector<8x192xf32>
    %85 = vector.extract_strided_slice %78 {offsets = [0, 192], sizes = [8, 64], strides = [1, 1]} : vector<8x256xf32> to vector<8x64xf32>
    %86 = math.tanh %85 : vector<8x64xf32>
    %87 = vector.extract_strided_slice %84 {offsets = [0, 0], sizes = [8, 64], strides = [1, 1]} : vector<8x192xf32> to vector<8x64xf32>
    %88 = vector.extract_strided_slice %84 {offsets = [0, 64], sizes = [8, 64], strides = [1, 1]} : vector<8x192xf32> to vector<8x64xf32>
    %89 = vector.extract_strided_slice %84 {offsets = [0, 128], sizes = [8, 64], strides = [1, 1]} : vector<8x192xf32> to vector<8x64xf32>
    %90 = arith.mulf %88, %51 : vector<8x64xf32>
    %91 = arith.mulf %87, %86 : vector<8x64xf32>
    %92 = arith.addf %90, %91 : vector<8x64xf32>
    %93 = math.tanh %92 : vector<8x64xf32>
    %94 = arith.mulf %89, %93 : vector<8x64xf32>
    %c8_31 = arith.constant 8 : index
    %c0_32 = arith.constant 0 : index
    %95 = vector.load %arg5[%c8_31, %c0_32] : memref<64x64xf32, #tpu.memory_space<vmem>>, vector<8x64xf32>
    tpu.vector_store %arg5[%c8_31, %c0_32], %94 {strides = array<i32>} : memref<64x64xf32, #tpu.memory_space<vmem>>, vector<8x64xf32>,
    %c16 = arith.constant 16 : index
    %c0_33 = arith.constant 0 : index
    %96 = vector.load %arg4[%c16, %c0_33] : memref<64x128xf32, #tpu.memory_space<vmem>>, vector<8x128xf32>
    %c32_34 = arith.constant 32 : index
    %c0_35 = arith.constant 0 : index
    %97 = vector.load %arg1[%c32_34, %c0_35] : memref<137x128xf32, #tpu.memory_space<vmem>>, vector<32x128xf32>
    %cst_36 = arith.constant dense<0.000000e+00> : vector<8x128xf32>
    %98 = tpu.matmul %74, %97, %cst_36 {dimension_numbers = #tpu.dot_dimension_numbers<[1], [0], [0], [1], [0, 0, 1, 1], [], []>} : vector<8x32xf32>, vector<32x128xf32>, vector<8x128xf32> -> vector<8x128xf32>
    %99 = arith.addf %96, %98 : vector<8x128xf32>
    %100 = vector.extract_strided_slice %99 {offsets = [0, 0], sizes = [8, 96], strides = [1, 1]} : vector<8x128xf32> to vector<8x96xf32>
    %101 = arith.negf %100 : vector<8x96xf32>
    %102 = math.exp %101 : vector<8x96xf32>
    %cst_37 = arith.constant 1.000000e+00 : f32
    %103 = vector.broadcast %cst_37 : f32 to vector<8x96xf32>
    %104 = arith.addf %103, %102 : vector<8x96xf32>
    %105 = arith.divf %103, %104 : vector<8x96xf32>
    %106 = vector.extract_strided_slice %99 {offsets = [0, 96], sizes = [8, 32], strides = [1, 1]} : vector<8x128xf32> to vector<8x32xf32>
    %107 = math.tanh %106 : vector<8x32xf32>
    %108 = vector.extract_strided_slice %105 {offsets = [0, 0], sizes = [8, 32], strides = [1, 1]} : vector<8x96xf32> to vector<8x32xf32>
    %109 = vector.extract_strided_slice %105 {offsets = [0, 32], sizes = [8, 32], strides = [1, 1]} : vector<8x96xf32> to vector<8x32xf32>
    %110 = vector.extract_strided_slice %105 {offsets = [0, 64], sizes = [8, 32], strides = [1, 1]} : vector<8x96xf32> to vector<8x32xf32>
    %111 = arith.mulf %109, %72 : vector<8x32xf32>
    %112 = arith.mulf %108, %107 : vector<8x32xf32>
    %113 = arith.addf %111, %112 : vector<8x32xf32>
    %114 = math.tanh %113 : vector<8x32xf32>
    %115 = arith.mulf %110, %114 : vector<8x32xf32>
    %116 = tpu.concatenate %115, %94 in 1 : vector<8x32xf32>, vector<8x64xf32> -> vector<8x96xf32>
    %c0_38 = arith.constant 0 : index
    %c0_39 = arith.constant 0 : index
    %117 = vector.load %arg2[%c0_38, %c0_39] : memref<97x256xf32, #tpu.memory_space<vmem>>, vector<96x256xf32>
    %cst_40 = arith.constant dense<0.000000e+00> : vector<8x256xf32>
    %118 = tpu.matmul %116, %117, %cst_40 {dimension_numbers = #tpu.dot_dimension_numbers<[1], [0], [0], [1], [0, 0, 1, 1], [], []>} : vector<8x96xf32>, vector<96x256xf32>, vector<8x256xf32> -> vector<8x256xf32>
    %119 = arith.addf %118, %9 : vector<8x256xf32>
    %120 = vector.extract_strided_slice %119 {offsets = [0, 0], sizes = [8, 192], strides = [1, 1]} : vector<8x256xf32> to vector<8x192xf32>
    %121 = arith.negf %120 : vector<8x192xf32>
    %122 = math.exp %121 : vector<8x192xf32>
    %cst_41 = arith.constant 1.000000e+00 : f32
    %123 = vector.broadcast %cst_41 : f32 to vector<8x192xf32>
    %124 = arith.addf %123, %122 : vector<8x192xf32>
    %125 = arith.divf %123, %124 : vector<8x192xf32>
    %126 = vector.extract_strided_slice %119 {offsets = [0, 192], sizes = [8, 64], strides = [1, 1]} : vector<8x256xf32> to vector<8x64xf32>
    %127 = math.tanh %126 : vector<8x64xf32>
    %128 = vector.extract_strided_slice %125 {offsets = [0, 0], sizes = [8, 64], strides = [1, 1]} : vector<8x192xf32> to vector<8x64xf32>
    %129 = vector.extract_strided_slice %125 {offsets = [0, 64], sizes = [8, 64], strides = [1, 1]} : vector<8x192xf32> to vector<8x64xf32>
    %130 = vector.extract_strided_slice %125 {offsets = [0, 128], sizes = [8, 64], strides = [1, 1]} : vector<8x192xf32> to vector<8x64xf32>
    %131 = arith.mulf %129, %92 : vector<8x64xf32>
    %132 = arith.mulf %128, %127 : vector<8x64xf32>
    %133 = arith.addf %131, %132 : vector<8x64xf32>
    %134 = math.tanh %133 : vector<8x64xf32>
    %135 = arith.mulf %130, %134 : vector<8x64xf32>
    %c16_42 = arith.constant 16 : index
    %c0_43 = arith.constant 0 : index
    %136 = vector.load %arg5[%c16_42, %c0_43] : memref<64x64xf32, #tpu.memory_space<vmem>>, vector<8x64xf32>
    tpu.vector_store %arg5[%c16_42, %c0_43], %135 {strides = array<i32>} : memref<64x64xf32, #tpu.memory_space<vmem>>, vector<8x64xf32>,
    %c24 = arith.constant 24 : index
    %c0_44 = arith.constant 0 : index
    %137 = vector.load %arg4[%c24, %c0_44] : memref<64x128xf32, #tpu.memory_space<vmem>>, vector<8x128xf32>
    %c32_45 = arith.constant 32 : index
    %c0_46 = arith.constant 0 : index
    %138 = vector.load %arg1[%c32_45, %c0_46] : memref<137x128xf32, #tpu.memory_space<vmem>>, vector<32x128xf32>
    %cst_47 = arith.constant dense<0.000000e+00> : vector<8x128xf32>
    %139 = tpu.matmul %115, %138, %cst_47 {dimension_numbers = #tpu.dot_dimension_numbers<[1], [0], [0], [1], [0, 0, 1, 1], [], []>} : vector<8x32xf32>, vector<32x128xf32>, vector<8x128xf32> -> vector<8x128xf32>
    %140 = arith.addf %137, %139 : vector<8x128xf32>
    %141 = vector.extract_strided_slice %140 {offsets = [0, 0], sizes = [8, 96], strides = [1, 1]} : vector<8x128xf32> to vector<8x96xf32>
    %142 = arith.negf %141 : vector<8x96xf32>
    %143 = math.exp %142 : vector<8x96xf32>
    %cst_48 = arith.constant 1.000000e+00 : f32
    %144 = vector.broadcast %cst_48 : f32 to vector<8x96xf32>
    %145 = arith.addf %144, %143 : vector<8x96xf32>
    %146 = arith.divf %144, %145 : vector<8x96xf32>
    %147 = vector.extract_strided_slice %140 {offsets = [0, 96], sizes = [8, 32], strides = [1, 1]} : vector<8x128xf32> to vector<8x32xf32>
    %148 = math.tanh %147 : vector<8x32xf32>
    %149 = vector.extract_strided_slice %146 {offsets = [0, 0], sizes = [8, 32], strides = [1, 1]} : vector<8x96xf32> to vector<8x32xf32>
    %150 = vector.extract_strided_slice %146 {offsets = [0, 32], sizes = [8, 32], strides = [1, 1]} : vector<8x96xf32> to vector<8x32xf32>
    %151 = vector.extract_strided_slice %146 {offsets = [0, 64], sizes = [8, 32], strides = [1, 1]} : vector<8x96xf32> to vector<8x32xf32>
    %152 = arith.mulf %150, %113 : vector<8x32xf32>
    %153 = arith.mulf %149, %148 : vector<8x32xf32>
    %154 = arith.addf %152, %153 : vector<8x32xf32>
    %155 = math.tanh %154 : vector<8x32xf32>
    %156 = arith.mulf %151, %155 : vector<8x32xf32>
    %157 = tpu.concatenate %156, %135 in 1 : vector<8x32xf32>, vector<8x64xf32> -> vector<8x96xf32>
    %c0_49 = arith.constant 0 : index
    %c0_50 = arith.constant 0 : index
    %158 = vector.load %arg2[%c0_49, %c0_50] : memref<97x256xf32, #tpu.memory_space<vmem>>, vector<96x256xf32>
    %cst_51 = arith.constant dense<0.000000e+00> : vector<8x256xf32>
    %159 = tpu.matmul %157, %158, %cst_51 {dimension_numbers = #tpu.dot_dimension_numbers<[1], [0], [0], [1], [0, 0, 1, 1], [], []>} : vector<8x96xf32>, vector<96x256xf32>, vector<8x256xf32> -> vector<8x256xf32>
    %160 = arith.addf %159, %9 : vector<8x256xf32>
    %161 = vector.extract_strided_slice %160 {offsets = [0, 0], sizes = [8, 192], strides = [1, 1]} : vector<8x256xf32> to vector<8x192xf32>
    %162 = arith.negf %161 : vector<8x192xf32>
    %163 = math.exp %162 : vector<8x192xf32>
    %cst_52 = arith.constant 1.000000e+00 : f32
    %164 = vector.broadcast %cst_52 : f32 to vector<8x192xf32>
    %165 = arith.addf %164, %163 : vector<8x192xf32>
    %166 = arith.divf %164, %165 : vector<8x192xf32>
    %167 = vector.extract_strided_slice %160 {offsets = [0, 192], sizes = [8, 64], strides = [1, 1]} : vector<8x256xf32> to vector<8x64xf32>
    %168 = math.tanh %167 : vector<8x64xf32>
    %169 = vector.extract_strided_slice %166 {offsets = [0, 0], sizes = [8, 64], strides = [1, 1]} : vector<8x192xf32> to vector<8x64xf32>
    %170 = vector.extract_strided_slice %166 {offsets = [0, 64], sizes = [8, 64], strides = [1, 1]} : vector<8x192xf32> to vector<8x64xf32>
    %171 = vector.extract_strided_slice %166 {offsets = [0, 128], sizes = [8, 64], strides = [1, 1]} : vector<8x192xf32> to vector<8x64xf32>
    %172 = arith.mulf %170, %133 : vector<8x64xf32>
    %173 = arith.mulf %169, %168 : vector<8x64xf32>
    %174 = arith.addf %172, %173 : vector<8x64xf32>
    %175 = math.tanh %174 : vector<8x64xf32>
    %176 = arith.mulf %171, %175 : vector<8x64xf32>
    %c24_53 = arith.constant 24 : index
    %c0_54 = arith.constant 0 : index
    %177 = vector.load %arg5[%c24_53, %c0_54] : memref<64x64xf32, #tpu.memory_space<vmem>>, vector<8x64xf32>
    tpu.vector_store %arg5[%c24_53, %c0_54], %176 {strides = array<i32>} : memref<64x64xf32, #tpu.memory_space<vmem>>, vector<8x64xf32>,
    %c32_55 = arith.constant 32 : index
    %c0_56 = arith.constant 0 : index
    %178 = vector.load %arg4[%c32_55, %c0_56] : memref<64x128xf32, #tpu.memory_space<vmem>>, vector<8x128xf32>
    %c32_57 = arith.constant 32 : index
    %c0_58 = arith.constant 0 : index
    %179 = vector.load %arg1[%c32_57, %c0_58] : memref<137x128xf32, #tpu.memory_space<vmem>>, vector<32x128xf32>
    %cst_59 = arith.constant dense<0.000000e+00> : vector<8x128xf32>
    %180 = tpu.matmul %156, %179, %cst_59 {dimension_numbers = #tpu.dot_dimension_numbers<[1], [0], [0], [1], [0, 0, 1, 1], [], []>} : vector<8x32xf32>, vector<32x128xf32>, vector<8x128xf32> -> vector<8x128xf32>
    %181 = arith.addf %178, %180 : vector<8x128xf32>
    %182 = vector.extract_strided_slice %181 {offsets = [0, 0], sizes = [8, 96], strides = [1, 1]} : vector<8x128xf32> to vector<8x96xf32>
    %183 = arith.negf %182 : vector<8x96xf32>
    %184 = math.exp %183 : vector<8x96xf32>
    %cst_60 = arith.constant 1.000000e+00 : f32
    %185 = vector.broadcast %cst_60 : f32 to vector<8x96xf32>
    %186 = arith.addf %185, %184 : vector<8x96xf32>
    %187 = arith.divf %185, %186 : vector<8x96xf32>
    %188 = vector.extract_strided_slice %181 {offsets = [0, 96], sizes = [8, 32], strides = [1, 1]} : vector<8x128xf32> to vector<8x32xf32>
    %189 = math.tanh %188 : vector<8x32xf32>
    %190 = vector.extract_strided_slice %187 {offsets = [0, 0], sizes = [8, 32], strides = [1, 1]} : vector<8x96xf32> to vector<8x32xf32>
    %191 = vector.extract_strided_slice %187 {offsets = [0, 32], sizes = [8, 32], strides = [1, 1]} : vector<8x96xf32> to vector<8x32xf32>
    %192 = vector.extract_strided_slice %187 {offsets = [0, 64], sizes = [8, 32], strides = [1, 1]} : vector<8x96xf32> to vector<8x32xf32>
    %193 = arith.mulf %191, %154 : vector<8x32xf32>
    %194 = arith.mulf %190, %189 : vector<8x32xf32>
    %195 = arith.addf %193, %194 : vector<8x32xf32>
    %196 = math.tanh %195 : vector<8x32xf32>
    %197 = arith.mulf %192, %196 : vector<8x32xf32>
    %198 = tpu.concatenate %197, %176 in 1 : vector<8x32xf32>, vector<8x64xf32> -> vector<8x96xf32>
    %c0_61 = arith.constant 0 : index
    %c0_62 = arith.constant 0 : index
    %199 = vector.load %arg2[%c0_61, %c0_62] : memref<97x256xf32, #tpu.memory_space<vmem>>, vector<96x256xf32>
    %cst_63 = arith.constant dense<0.000000e+00> : vector<8x256xf32>
    %200 = tpu.matmul %198, %199, %cst_63 {dimension_numbers = #tpu.dot_dimension_numbers<[1], [0], [0], [1], [0, 0, 1, 1], [], []>} : vector<8x96xf32>, vector<96x256xf32>, vector<8x256xf32> -> vector<8x256xf32>
    %201 = arith.addf %200, %9 : vector<8x256xf32>
    %202 = vector.extract_strided_slice %201 {offsets = [0, 0], sizes = [8, 192], strides = [1, 1]} : vector<8x256xf32> to vector<8x192xf32>
    %203 = arith.negf %202 : vector<8x192xf32>
    %204 = math.exp %203 : vector<8x192xf32>
    %cst_64 = arith.constant 1.000000e+00 : f32
    %205 = vector.broadcast %cst_64 : f32 to vector<8x192xf32>
    %206 = arith.addf %205, %204 : vector<8x192xf32>
    %207 = arith.divf %205, %206 : vector<8x192xf32>
    %208 = vector.extract_strided_slice %201 {offsets = [0, 192], sizes = [8, 64], strides = [1, 1]} : vector<8x256xf32> to vector<8x64xf32>
    %209 = math.tanh %208 : vector<8x64xf32>
    %210 = vector.extract_strided_slice %207 {offsets = [0, 0], sizes = [8, 64], strides = [1, 1]} : vector<8x192xf32> to vector<8x64xf32>
    %211 = vector.extract_strided_slice %207 {offsets = [0, 64], sizes = [8, 64], strides = [1, 1]} : vector<8x192xf32> to vector<8x64xf32>
    %212 = vector.extract_strided_slice %207 {offsets = [0, 128], sizes = [8, 64], strides = [1, 1]} : vector<8x192xf32> to vector<8x64xf32>
    %213 = arith.mulf %211, %174 : vector<8x64xf32>
    %214 = arith.mulf %210, %209 : vector<8x64xf32>
    %215 = arith.addf %213, %214 : vector<8x64xf32>
    %216 = math.tanh %215 : vector<8x64xf32>
    %217 = arith.mulf %212, %216 : vector<8x64xf32>
    %c32_65 = arith.constant 32 : index
    %c0_66 = arith.constant 0 : index
    %218 = vector.load %arg5[%c32_65, %c0_66] : memref<64x64xf32, #tpu.memory_space<vmem>>, vector<8x64xf32>
    tpu.vector_store %arg5[%c32_65, %c0_66], %217 {strides = array<i32>} : memref<64x64xf32, #tpu.memory_space<vmem>>, vector<8x64xf32>,
    %c40 = arith.constant 40 : index
    %c0_67 = arith.constant 0 : index
    %219 = vector.load %arg4[%c40, %c0_67] : memref<64x128xf32, #tpu.memory_space<vmem>>, vector<8x128xf32>
    %c32_68 = arith.constant 32 : index
    %c0_69 = arith.constant 0 : index
    %220 = vector.load %arg1[%c32_68, %c0_69] : memref<137x128xf32, #tpu.memory_space<vmem>>, vector<32x128xf32>
    %cst_70 = arith.constant dense<0.000000e+00> : vector<8x128xf32>
    %221 = tpu.matmul %197, %220, %cst_70 {dimension_numbers = #tpu.dot_dimension_numbers<[1], [0], [0], [1], [0, 0, 1, 1], [], []>} : vector<8x32xf32>, vector<32x128xf32>, vector<8x128xf32> -> vector<8x128xf32>
    %222 = arith.addf %219, %221 : vector<8x128xf32>
    %223 = vector.extract_strided_slice %222 {offsets = [0, 0], sizes = [8, 96], strides = [1, 1]} : vector<8x128xf32> to vector<8x96xf32>
    %224 = arith.negf %223 : vector<8x96xf32>
    %225 = math.exp %224 : vector<8x96xf32>
    %cst_71 = arith.constant 1.000000e+00 : f32
    %226 = vector.broadcast %cst_71 : f32 to vector<8x96xf32>
    %227 = arith.addf %226, %225 : vector<8x96xf32>
    %228 = arith.divf %226, %227 : vector<8x96xf32>
    %229 = vector.extract_strided_slice %222 {offsets = [0, 96], sizes = [8, 32], strides = [1, 1]} : vector<8x128xf32> to vector<8x32xf32>
    %230 = math.tanh %229 : vector<8x32xf32>
    %231 = vector.extract_strided_slice %228 {offsets = [0, 0], sizes = [8, 32], strides = [1, 1]} : vector<8x96xf32> to vector<8x32xf32>
    %232 = vector.extract_strided_slice %228 {offsets = [0, 32], sizes = [8, 32], strides = [1, 1]} : vector<8x96xf32> to vector<8x32xf32>
    %233 = vector.extract_strided_slice %228 {offsets = [0, 64], sizes = [8, 32], strides = [1, 1]} : vector<8x96xf32> to vector<8x32xf32>
    %234 = arith.mulf %232, %195 : vector<8x32xf32>
    %235 = arith.mulf %231, %230 : vector<8x32xf32>
    %236 = arith.addf %234, %235 : vector<8x32xf32>
    %237 = math.tanh %236 : vector<8x32xf32>
    %238 = arith.mulf %233, %237 : vector<8x32xf32>
    %239 = tpu.concatenate %238, %217 in 1 : vector<8x32xf32>, vector<8x64xf32> -> vector<8x96xf32>
    %c0_72 = arith.constant 0 : index
    %c0_73 = arith.constant 0 : index
    %240 = vector.load %arg2[%c0_72, %c0_73] : memref<97x256xf32, #tpu.memory_space<vmem>>, vector<96x256xf32>
    %cst_74 = arith.constant dense<0.000000e+00> : vector<8x256xf32>
    %241 = tpu.matmul %239, %240, %cst_74 {dimension_numbers = #tpu.dot_dimension_numbers<[1], [0], [0], [1], [0, 0, 1, 1], [], []>} : vector<8x96xf32>, vector<96x256xf32>, vector<8x256xf32> -> vector<8x256xf32>
    %242 = arith.addf %241, %9 : vector<8x256xf32>
    %243 = vector.extract_strided_slice %242 {offsets = [0, 0], sizes = [8, 192], strides = [1, 1]} : vector<8x256xf32> to vector<8x192xf32>
    %244 = arith.negf %243 : vector<8x192xf32>
    %245 = math.exp %244 : vector<8x192xf32>
    %cst_75 = arith.constant 1.000000e+00 : f32
    %246 = vector.broadcast %cst_75 : f32 to vector<8x192xf32>
    %247 = arith.addf %246, %245 : vector<8x192xf32>
    %248 = arith.divf %246, %247 : vector<8x192xf32>
    %249 = vector.extract_strided_slice %242 {offsets = [0, 192], sizes = [8, 64], strides = [1, 1]} : vector<8x256xf32> to vector<8x64xf32>
    %250 = math.tanh %249 : vector<8x64xf32>
    %251 = vector.extract_strided_slice %248 {offsets = [0, 0], sizes = [8, 64], strides = [1, 1]} : vector<8x192xf32> to vector<8x64xf32>
    %252 = vector.extract_strided_slice %248 {offsets = [0, 64], sizes = [8, 64], strides = [1, 1]} : vector<8x192xf32> to vector<8x64xf32>
    %253 = vector.extract_strided_slice %248 {offsets = [0, 128], sizes = [8, 64], strides = [1, 1]} : vector<8x192xf32> to vector<8x64xf32>
    %254 = arith.mulf %252, %215 : vector<8x64xf32>
    %255 = arith.mulf %251, %250 : vector<8x64xf32>
    %256 = arith.addf %254, %255 : vector<8x64xf32>
    %257 = math.tanh %256 : vector<8x64xf32>
    %258 = arith.mulf %253, %257 : vector<8x64xf32>
    %c40_76 = arith.constant 40 : index
    %c0_77 = arith.constant 0 : index
    %259 = vector.load %arg5[%c40_76, %c0_77] : memref<64x64xf32, #tpu.memory_space<vmem>>, vector<8x64xf32>
    tpu.vector_store %arg5[%c40_76, %c0_77], %258 {strides = array<i32>} : memref<64x64xf32, #tpu.memory_space<vmem>>, vector<8x64xf32>,
    %c48 = arith.constant 48 : index
    %c0_78 = arith.constant 0 : index
    %260 = vector.load %arg4[%c48, %c0_78] : memref<64x128xf32, #tpu.memory_space<vmem>>, vector<8x128xf32>
    %c32_79 = arith.constant 32 : index
    %c0_80 = arith.constant 0 : index
    %261 = vector.load %arg1[%c32_79, %c0_80] : memref<137x128xf32, #tpu.memory_space<vmem>>, vector<32x128xf32>
    %cst_81 = arith.constant dense<0.000000e+00> : vector<8x128xf32>
    %262 = tpu.matmul %238, %261, %cst_81 {dimension_numbers = #tpu.dot_dimension_numbers<[1], [0], [0], [1], [0, 0, 1, 1], [], []>} : vector<8x32xf32>, vector<32x128xf32>, vector<8x128xf32> -> vector<8x128xf32>
    %263 = arith.addf %260, %262 : vector<8x128xf32>
    %264 = vector.extract_strided_slice %263 {offsets = [0, 0], sizes = [8, 96], strides = [1, 1]} : vector<8x128xf32> to vector<8x96xf32>
    %265 = arith.negf %264 : vector<8x96xf32>
    %266 = math.exp %265 : vector<8x96xf32>
    %cst_82 = arith.constant 1.000000e+00 : f32
    %267 = vector.broadcast %cst_82 : f32 to vector<8x96xf32>
    %268 = arith.addf %267, %266 : vector<8x96xf32>
    %269 = arith.divf %267, %268 : vector<8x96xf32>
    %270 = vector.extract_strided_slice %263 {offsets = [0, 96], sizes = [8, 32], strides = [1, 1]} : vector<8x128xf32> to vector<8x32xf32>
    %271 = math.tanh %270 : vector<8x32xf32>
    %272 = vector.extract_strided_slice %269 {offsets = [0, 0], sizes = [8, 32], strides = [1, 1]} : vector<8x96xf32> to vector<8x32xf32>
    %273 = vector.extract_strided_slice %269 {offsets = [0, 32], sizes = [8, 32], strides = [1, 1]} : vector<8x96xf32> to vector<8x32xf32>
    %274 = vector.extract_strided_slice %269 {offsets = [0, 64], sizes = [8, 32], strides = [1, 1]} : vector<8x96xf32> to vector<8x32xf32>
    %275 = arith.mulf %273, %236 : vector<8x32xf32>
    %276 = arith.mulf %272, %271 : vector<8x32xf32>
    %277 = arith.addf %275, %276 : vector<8x32xf32>
    %278 = math.tanh %277 : vector<8x32xf32>
    %279 = arith.mulf %274, %278 : vector<8x32xf32>
    %280 = tpu.concatenate %279, %258 in 1 : vector<8x32xf32>, vector<8x64xf32> -> vector<8x96xf32>
    %c0_83 = arith.constant 0 : index
    %c0_84 = arith.constant 0 : index
    %281 = vector.load %arg2[%c0_83, %c0_84] : memref<97x256xf32, #tpu.memory_space<vmem>>, vector<96x256xf32>
    %cst_85 = arith.constant dense<0.000000e+00> : vector<8x256xf32>
    %282 = tpu.matmul %280, %281, %cst_85 {dimension_numbers = #tpu.dot_dimension_numbers<[1], [0], [0], [1], [0, 0, 1, 1], [], []>} : vector<8x96xf32>, vector<96x256xf32>, vector<8x256xf32> -> vector<8x256xf32>
    %283 = arith.addf %282, %9 : vector<8x256xf32>
    %284 = vector.extract_strided_slice %283 {offsets = [0, 0], sizes = [8, 192], strides = [1, 1]} : vector<8x256xf32> to vector<8x192xf32>
    %285 = arith.negf %284 : vector<8x192xf32>
    %286 = math.exp %285 : vector<8x192xf32>
    %cst_86 = arith.constant 1.000000e+00 : f32
    %287 = vector.broadcast %cst_86 : f32 to vector<8x192xf32>
    %288 = arith.addf %287, %286 : vector<8x192xf32>
    %289 = arith.divf %287, %288 : vector<8x192xf32>
    %290 = vector.extract_strided_slice %283 {offsets = [0, 192], sizes = [8, 64], strides = [1, 1]} : vector<8x256xf32> to vector<8x64xf32>
    %291 = math.tanh %290 : vector<8x64xf32>
    %292 = vector.extract_strided_slice %289 {offsets = [0, 0], sizes = [8, 64], strides = [1, 1]} : vector<8x192xf32> to vector<8x64xf32>
    %293 = vector.extract_strided_slice %289 {offsets = [0, 64], sizes = [8, 64], strides = [1, 1]} : vector<8x192xf32> to vector<8x64xf32>
    %294 = vector.extract_strided_slice %289 {offsets = [0, 128], sizes = [8, 64], strides = [1, 1]} : vector<8x192xf32> to vector<8x64xf32>
    %295 = arith.mulf %293, %256 : vector<8x64xf32>
    %296 = arith.mulf %292, %291 : vector<8x64xf32>
    %297 = arith.addf %295, %296 : vector<8x64xf32>
    %298 = math.tanh %297 : vector<8x64xf32>
    %299 = arith.mulf %294, %298 : vector<8x64xf32>
    %c48_87 = arith.constant 48 : index
    %c0_88 = arith.constant 0 : index
    %300 = vector.load %arg5[%c48_87, %c0_88] : memref<64x64xf32, #tpu.memory_space<vmem>>, vector<8x64xf32>
    tpu.vector_store %arg5[%c48_87, %c0_88], %299 {strides = array<i32>} : memref<64x64xf32, #tpu.memory_space<vmem>>, vector<8x64xf32>,
    %c56 = arith.constant 56 : index
    %c0_89 = arith.constant 0 : index
    %301 = vector.load %arg4[%c56, %c0_89] : memref<64x128xf32, #tpu.memory_space<vmem>>, vector<8x128xf32>
    %c32_90 = arith.constant 32 : index
    %c0_91 = arith.constant 0 : index
    %302 = vector.load %arg1[%c32_90, %c0_91] : memref<137x128xf32, #tpu.memory_space<vmem>>, vector<32x128xf32>
    %cst_92 = arith.constant dense<0.000000e+00> : vector<8x128xf32>
    %303 = tpu.matmul %279, %302, %cst_92 {dimension_numbers = #tpu.dot_dimension_numbers<[1], [0], [0], [1], [0, 0, 1, 1], [], []>} : vector<8x32xf32>, vector<32x128xf32>, vector<8x128xf32> -> vector<8x128xf32>
    %304 = arith.addf %301, %303 : vector<8x128xf32>
    %305 = vector.extract_strided_slice %304 {offsets = [0, 0], sizes = [8, 96], strides = [1, 1]} : vector<8x128xf32> to vector<8x96xf32>
    %306 = arith.negf %305 : vector<8x96xf32>
    %307 = math.exp %306 : vector<8x96xf32>
    %cst_93 = arith.constant 1.000000e+00 : f32
    %308 = vector.broadcast %cst_93 : f32 to vector<8x96xf32>
    %309 = arith.addf %308, %307 : vector<8x96xf32>
    %310 = arith.divf %308, %309 : vector<8x96xf32>
    %311 = vector.extract_strided_slice %304 {offsets = [0, 96], sizes = [8, 32], strides = [1, 1]} : vector<8x128xf32> to vector<8x32xf32>
    %312 = math.tanh %311 : vector<8x32xf32>
    %313 = vector.extract_strided_slice %310 {offsets = [0, 0], sizes = [8, 32], strides = [1, 1]} : vector<8x96xf32> to vector<8x32xf32>
    %314 = vector.extract_strided_slice %310 {offsets = [0, 32], sizes = [8, 32], strides = [1, 1]} : vector<8x96xf32> to vector<8x32xf32>
    %315 = vector.extract_strided_slice %310 {offsets = [0, 64], sizes = [8, 32], strides = [1, 1]} : vector<8x96xf32> to vector<8x32xf32>
    %316 = arith.mulf %314, %277 : vector<8x32xf32>
    %317 = arith.mulf %313, %312 : vector<8x32xf32>
    %318 = arith.addf %316, %317 : vector<8x32xf32>
    %319 = math.tanh %318 : vector<8x32xf32>
    %320 = arith.mulf %315, %319 : vector<8x32xf32>
    %321 = tpu.concatenate %320, %299 in 1 : vector<8x32xf32>, vector<8x64xf32> -> vector<8x96xf32>
    %c0_94 = arith.constant 0 : index
    %c0_95 = arith.constant 0 : index
    %322 = vector.load %arg2[%c0_94, %c0_95] : memref<97x256xf32, #tpu.memory_space<vmem>>, vector<96x256xf32>
    %cst_96 = arith.constant dense<0.000000e+00> : vector<8x256xf32>
    %323 = tpu.matmul %321, %322, %cst_96 {dimension_numbers = #tpu.dot_dimension_numbers<[1], [0], [0], [1], [0, 0, 1, 1], [], []>} : vector<8x96xf32>, vector<96x256xf32>, vector<8x256xf32> -> vector<8x256xf32>
    %324 = arith.addf %323, %9 : vector<8x256xf32>
    %325 = vector.extract_strided_slice %324 {offsets = [0, 0], sizes = [8, 192], strides = [1, 1]} : vector<8x256xf32> to vector<8x192xf32>
    %326 = arith.negf %325 : vector<8x192xf32>
    %327 = math.exp %326 : vector<8x192xf32>
    %cst_97 = arith.constant 1.000000e+00 : f32
    %328 = vector.broadcast %cst_97 : f32 to vector<8x192xf32>
    %329 = arith.addf %328, %327 : vector<8x192xf32>
    %330 = arith.divf %328, %329 : vector<8x192xf32>
    %331 = vector.extract_strided_slice %324 {offsets = [0, 192], sizes = [8, 64], strides = [1, 1]} : vector<8x256xf32> to vector<8x64xf32>
    %332 = math.tanh %331 : vector<8x64xf32>
    %333 = vector.extract_strided_slice %330 {offsets = [0, 0], sizes = [8, 64], strides = [1, 1]} : vector<8x192xf32> to vector<8x64xf32>
    %334 = vector.extract_strided_slice %330 {offsets = [0, 64], sizes = [8, 64], strides = [1, 1]} : vector<8x192xf32> to vector<8x64xf32>
    %335 = vector.extract_strided_slice %330 {offsets = [0, 128], sizes = [8, 64], strides = [1, 1]} : vector<8x192xf32> to vector<8x64xf32>
    %336 = arith.mulf %334, %297 : vector<8x64xf32>
    %337 = arith.mulf %333, %332 : vector<8x64xf32>
    %338 = arith.addf %336, %337 : vector<8x64xf32>
    %339 = math.tanh %338 : vector<8x64xf32>
    %340 = arith.mulf %335, %339 : vector<8x64xf32>
    %c56_98 = arith.constant 56 : index
    %c0_99 = arith.constant 0 : index
    %341 = vector.load %arg5[%c56_98, %c0_99] : memref<64x64xf32, #tpu.memory_space<vmem>>, vector<8x64xf32>
    tpu.vector_store %arg5[%c56_98, %c0_99], %340 {strides = array<i32>} : memref<64x64xf32, #tpu.memory_space<vmem>>, vector<8x64xf32>,
    %c0_100 = arith.constant 0 : index
    %c0_101 = arith.constant 0 : index
    %342 = vector.load %arg5[%c0_100, %c0_101] : memref<64x64xf32, #tpu.memory_space<vmem>>, vector<64x64xf32>
    %c72 = arith.constant 72 : index
    %c0_102 = arith.constant 0 : index
    %343 = vector.load %arg1[%c72, %c0_102] : memref<137x128xf32, #tpu.memory_space<vmem>>, vector<64x128xf32>
    %cst_103 = arith.constant dense<0.000000e+00> : vector<64x128xf32>
    %344 = tpu.matmul %342, %343, %cst_103 {dimension_numbers = #tpu.dot_dimension_numbers<[1], [0], [0], [1], [0, 0, 1, 1], [], []>} : vector<64x64xf32>, vector<64x128xf32>, vector<64x128xf32> -> vector<64x128xf32>
    %c136 = arith.constant 136 : index
    %c0_104 = arith.constant 0 : index
    %345 = vector.load %arg1[%c136, %c0_104] : memref<137x128xf32, #tpu.memory_space<vmem>>, vector<1x128xf32>
    %346 = vector.broadcast %345 : vector<1x128xf32> to vector<64x128xf32>
    %347 = arith.addf %344, %346 : vector<64x128xf32>
    %348 = vector.extract_strided_slice %347 {offsets = [0, 0], sizes = [64, 1], strides = [1, 1]} : vector<64x128xf32> to vector<64x1xf32>
    %c0_105 = arith.constant 0 : index
    %c0_106 = arith.constant 0 : index
    %349 = vector.load %arg3[%c0_105, %c0_106] : memref<64x1xf32, #tpu.memory_space<vmem>>, vector<64x1xf32>
    tpu.vector_store %arg3[%c0_105, %c0_106], %348 {strides = array<i32>} : memref<64x1xf32, #tpu.memory_space<vmem>>, vector<64x1xf32>,
    return
  }
}

</mosaic_0001>

<llo_original>
// kernel: decoder_rnn_forward.1
$region0: #{decoder_rnn_forward.1}
  #allocation0 [shape = 'u32[]', space=smem, size = 0x4, offset = 0x4, fixed_abs, tag = 'smem constant byte address 0x4 - core index']
  #allocation1 [shape = 'u32[144,128]{1,0:T(1,128)}', space=vmem, size = 0x12000, scoped, tag = 'internal scratch']
  #allocation2 [shape = 'f32[64,128]{1,0:T(8,128)}', space=vmem, size = 0x8000, scoped, tag = 'scratch operand']
  #allocation3 [shape = 'f32[64,64]{1,0:T(8,128)}', space=vmem, size = 0x8000, scoped, tag = 'scratch operand']
  %s0 = inlined_call_operand.vmem [shape: f32[64,32], index: 0, kind: input, shape index: {}]
  %s1 = inlined_call_operand.vmem [shape: f32[137,128], index: 1, kind: input, shape index: {}]
  %s2 = inlined_call_operand.vmem [shape: f32[97,256], index: 2, kind: input, shape index: {}]
  %s3 = inlined_call_operand.vmem [shape: f32[64,1], index: 3, kind: output, shape index: {}]
  %s4 = sld [smem:[#allocation0]]
  $region22: #{decoder_rnn_forward.1} parent=0
    _
  %s6 = ssub.s32 1, %s4
  %s7 = scalar_select 0, %s6, %s4
  // Predicated region
  $region2: #{decoder_rnn_forward.1} parent=0 // pred_check
    _
  $region3: #{decoder_rnn_forward.1} parent=0 // pred_check_branch
    %9 = sbr.rel (0) target = $region5
  $region4: #{decoder_rnn_forward.1} parent=0 // pred_region
    _
  $region5: #{decoder_rnn_forward.1} parent=0 // pred_fallthru
    _
  // Predicated region
  $region6: #{decoder_rnn_forward.1} parent=0 // pred_check
    _
  $region7: #{decoder_rnn_forward.1} parent=0 // pred_check_branch
    %11 = sbr.rel (0) target = $region9
  $region8: #{decoder_rnn_forward.1} parent=0 // pred_region
    _
  $region9: #{decoder_rnn_forward.1} parent=0 // pred_fallthru
    _
  // Predicated region
  $region10: #{decoder_rnn_forward.1} parent=0 // pred_check
    _
  $region11: #{decoder_rnn_forward.1} parent=0 // pred_check_branch
    %13 = sbr.rel (0) target = $region13
  $region12: #{decoder_rnn_forward.1} parent=0 // pred_region
    _
  $region13: #{decoder_rnn_forward.1} parent=0 // pred_fallthru
    _
  %v14 = vld [vmem:[%s0] sm:$0xff]
  %v15 = vld [vmem:[%s0 + $0x8] sm:$0xff]
  %v16 = vld [vmem:[%s0 + $0x10] sm:$0xff]
  %v17 = vld [vmem:[%s0 + $0x18] sm:$0xff]
  %v18 = vld [vmem:[%s0 + $0x20] sm:$0xff]
  %v19 = vld [vmem:[%s0 + $0x28] sm:$0xff]
  %v20 = vld [vmem:[%s0 + $0x30] sm:$0xff]
  %v21 = vld [vmem:[%s0 + $0x38] sm:$0xff]
  %v22 = vld [vmem:[%s1] sm:$0xff]
  %v23 = vld [vmem:[%s1 + $0x8] sm:$0xff]
  %v24 = vld [vmem:[%s1 + $0x10] sm:$0xff]
  %v25 = vld [vmem:[%s1 + $0x18] sm:$0xff]
  %v26 = vld [vmem:[%s1 + $0x40] sm:$0x1]
  %v27 = vlaneseq
  %v28 = vshrl.u32 %v27, 7
  %v29 = vsub.s32 0, %v28
  %v30 = vrot.slane %v26, %v29
  %vm31 = vcmask 261120
  %v33 = vsel %vm31, %v14, 0
  %v36 = vsel %vm31, %v15, 0
  %v39 = vsel %vm31, %v16, 0
  %v42 = vsel %vm31, %v17, 0
  %v45 = vsel %vm31, %v18, 0
  %v48 = vsel %vm31, %v19, 0
  %v51 = vsel %vm31, %v20, 0
  %v54 = vsel %vm31, %v21, 0
  %56 = vmatprep.subr.mxu0 0.0
  %57 = vmatpush1.msra.mxu0 %v22
  %58 = vmatprep.subr.mxu0 0.0
  %59 = vmatpush1.msra.mxu0 %v23
  %60 = vmatprep.subr.mxu0 0.0
  %61 = vmatpush1.msra.mxu0 %v24
  %62 = vmatprep.subr.mxu0 0.0
  %63 = vmatpush1.msra.mxu0 %v25
  %64 = vmatprep.subr.mxu0 0.0
  %65 = vmatpush1.msra.mxu0 0.0
  %66 = vmatprep.subr.mxu0 0.0
  %67 = vmatpush1.msra.mxu0 0.0
  %68 = vmatprep.subr.mxu0 0.0
  %69 = vmatpush1.msra.mxu0 0.0
  %70 = vmatprep.subr.mxu0 0.0
  %71 = vmatpush1.msra.mxu0 0.0
  %72 = vmatprep.subr.mxu0 0.0
  %73 = vmatpush1.msra.mxu0 0.0
  %74 = vmatprep.subr.mxu0 0.0
  %75 = vmatpush1.msra.mxu0 0.0
  %76 = vmatprep.subr.mxu0 0.0
  %77 = vmatpush1.msra.mxu0 0.0
  %78 = vmatprep.subr.mxu0 0.0
  %79 = vmatpush1.msra.mxu0 0.0
  %80 = vmatprep.subr.mxu0 0.0
  %81 = vmatpush1.msra.mxu0 0.0
  %82 = vmatprep.subr.mxu0 0.0
  %83 = vmatpush1.msra.mxu0 0.0
  %84 = vmatprep.subr.mxu0 0.0
  %85 = vmatpush1.msra.mxu0 0.0
  %86 = vmatprep.subr.mxu0 0.0
  %87 = vmatpush1.msra.mxu0 0.0
  %88 = vmatprep.subr.mxu0 0.0
  %89 = vmatpush1.msra.mxu0 0.0
  %90 = vmatprep.subr.mxu0 0.0
  %91 = vmatpush1.msra.mxu0 0.0
  %92 = vmatprep.subr.mxu0 0.0
  %93 = vmatpush1.msra.mxu0 0.0
  %94 = vmatprep.subr.mxu0 0.0
  %95 = vmatpush1.msra.mxu0 0.0
  %96 = vmatprep.subr.mxu0 0.0
  %97 = vmatpush1.msra.mxu0 0.0
  %98 = vmatprep.subr.mxu0 0.0
  %99 = vmatpush1.msra.mxu0 0.0
  %100 = vmatprep.subr.mxu0 0.0
  %101 = vmatpush1.msra.mxu0 0.0
  %102 = vmatprep.subr.mxu0 0.0
  %103 = vmatpush1.msra.mxu0 0.0
  %104 = vmatprep.subr.mxu0 0.0
  %105 = vmatpush1.msra.mxu0 0.0
  %106 = vmatprep.subr.mxu0 0.0
  %107 = vmatpush1.msra.mxu0 0.0
  %108 = vmatprep.subr.mxu0 0.0
  %109 = vmatpush1.msra.mxu0 0.0
  %110 = vmatprep.subr.mxu0 0.0
  %111 = vmatpush1.msra.mxu0 0.0
  %112 = vmatprep.subr.mxu0 0.0
  %113 = vmatpush1.msra.mxu0 0.0
  %114 = vmatprep.subr.mxu0 0.0
  %115 = vmatpush1.msra.mxu0 0.0
  %116 = vmatprep.subr.mxu0 0.0
  %117 = vmatpush1.msra.mxu0 0.0
  %118 = vmatprep.subr.mxu0 0.0
  %119 = vmatpush1.msra.mxu0 0.0
  %120 = vmatprep.mubr.f32.mxu0 0.0
  %121 = vmatmul.mubr.f32.gmra.mrb[0].mxu0 %v33
  %v122 = vpop.f32.mrb[0].mxu0
  %v123 = vadd.f32 %v30, %v122
  %v124 = vpop.f32.mrb[0].mxu0
  %125 = vmatprep.mubr.f32.mxu0 0.0
  %126 = vmatmul.mubr.f32.gmra.mrb[0].mxu0 %v36
  %v127 = vpop.f32.mrb[0].mxu0
  %v128 = vadd.f32 %v30, %v127
  %v129 = vpop.f32.mrb[0].mxu0
  %130 = vmatprep.mubr.f32.mxu0 0.0
  %131 = vmatmul.mubr.f32.gmra.mrb[0].mxu0 %v39
  %v132 = vpop.f32.mrb[0].mxu0
  %v133 = vadd.f32 %v30, %v132
  %v134 = vpop.f32.mrb[0].mxu0
  %135 = vmatprep.mubr.f32.mxu0 0.0
  %136 = vmatmul.mubr.f32.gmra.mrb[0].mxu0 %v42
  %v137 = vpop.f32.mrb[0].mxu0
  %v138 = vadd.f32 %v30, %v137
  %v139 = vpop.f32.mrb[0].mxu0
  %140 = vmatprep.mubr.f32.mxu0 0.0
  %141 = vmatmul.mubr.f32.gmra.mrb[0].mxu0 %v45
  %v142 = vpop.f32.mrb[0].mxu0
  %v143 = vadd.f32 %v30, %v142
  %v144 = vpop.f32.mrb[0].mxu0
  %145 = vmatprep.mubr.f32.mxu0 0.0
  %146 = vmatmul.mubr.f32.gmra.mrb[0].mxu0 %v48
  %v147 = vpop.f32.mrb[0].mxu0
  %v148 = vadd.f32 %v30, %v147
  %v149 = vpop.f32.mrb[0].mxu0
  %150 = vmatprep.mubr.f32.mxu0 0.0
  %151 = vmatmul.mubr.f32.gmra.mrb[0].mxu0 %v51
  %v152 = vpop.f32.mrb[0].mxu0
  %v153 = vadd.f32 %v30, %v152
  %v154 = vpop.f32.mrb[0].mxu0
  %155 = vmatprep.mubr.f32.mxu0 0.0
  %156 = vmatmul.mubr.f32.gmra.mrb[0].mxu0 %v54
  %v157 = vpop.f32.mrb[0].mxu0
  %v158 = vadd.f32 %v30, %v157
  %v159 = vpop.f32.mrb[0].mxu0
  %160 = vdwg.mxu0
  %161 = vst [vmem:[#allocation2] sm:$0xff] %v123
  %162 = vst [vmem:[#allocation2 + $0x8] sm:$0xff] %v128
  %163 = vst [vmem:[#allocation2 + $0x10] sm:$0xff] %v133
  %164 = vst [vmem:[#allocation2 + $0x18] sm:$0xff] %v138
  %165 = vst [vmem:[#allocation2 + $0x20] sm:$0xff] %v143
  %166 = vst [vmem:[#allocation2 + $0x28] sm:$0xff] %v148
  %167 = vst [vmem:[#allocation2 + $0x30] sm:$0xff] %v153
  %168 = vst [vmem:[#allocation2 + $0x38] sm:$0xff] %v158
  %s169 = scalar_lea.vmem %s2, 192
  %v170 = vld [vmem:[%s169] ss:$8 sm:$0x3]
  %v172 = vlaneseq
  %v173 = vshrl.u32 %v172, 7
  %v174 = vsub.s32 0, %v173
  %v175 = vrot.slane %v170, %v174
  %v176 = vlaneseq
  %v177 = vshrl.u32 %v176, 7
  %v178 = vsub.s32 1, %v177
  %v179 = vrot.slane %v170, %v178
  %v182 = vld [vmem:[#allocation2] sm:$0xff]
  %v183 = vld [vmem:[%s1 + $0x20] sm:$0xff]
  %v184 = vld [vmem:[%s1 + $0x28] sm:$0xff]
  %v185 = vld [vmem:[%s1 + $0x30] sm:$0xff]
  %v186 = vld [vmem:[%s1 + $0x38] sm:$0xff]
  %v188 = vsel %vm31, 0.0, 0
  %190 = vmatprep.subr.mxu0 0.0
  %191 = vmatpush1.msra.mxu0 %v183
  %192 = vmatprep.subr.mxu0 0.0
  %193 = vmatpush1.msra.mxu0 %v184
  %194 = vmatprep.subr.mxu0 0.0
  %195 = vmatpush1.msra.mxu0 %v185
  %196 = vmatprep.subr.mxu0 0.0
  %197 = vmatpush1.msra.mxu0 %v186
  %198 = vmatprep.subr.mxu0 0.0
  %199 = vmatpush1.msra.mxu0 0.0
  %200 = vmatprep.subr.mxu0 0.0
  %201 = vmatpush1.msra.mxu0 0.0
  %202 = vmatprep.subr.mxu0 0.0
  %203 = vmatpush1.msra.mxu0 0.0
  %204 = vmatprep.subr.mxu0 0.0
  %205 = vmatpush1.msra.mxu0 0.0
  %206 = vmatprep.subr.mxu0 0.0
  %207 = vmatpush1.msra.mxu0 0.0
  %208 = vmatprep.subr.mxu0 0.0
  %209 = vmatpush1.msra.mxu0 0.0
  %210 = vmatprep.subr.mxu0 0.0
  %211 = vmatpush1.msra.mxu0 0.0
  %212 = vmatprep.subr.mxu0 0.0
  %213 = vmatpush1.msra.mxu0 0.0
  %214 = vmatprep.subr.mxu0 0.0
  %215 = vmatpush1.msra.mxu0 0.0
  %216 = vmatprep.subr.mxu0 0.0
  %217 = vmatpush1.msra.mxu0 0.0
  %218 = vmatprep.subr.mxu0 0.0
  %219 = vmatpush1.msra.mxu0 0.0
  %220 = vmatprep.subr.mxu0 0.0
  %221 = vmatpush1.msra.mxu0 0.0
  %222 = vmatprep.subr.mxu0 0.0
  %223 = vmatpush1.msra.mxu0 0.0
  %224 = vmatprep.subr.mxu0 0.0
  %225 = vmatpush1.msra.mxu0 0.0
  %226 = vmatprep.subr.mxu0 0.0
  %227 = vmatpush1.msra.mxu0 0.0
  %228 = vmatprep.subr.mxu0 0.0
  %229 = vmatpush1.msra.mxu0 0.0
  %230 = vmatprep.subr.mxu0 0.0
  %231 = vmatpush1.msra.mxu0 0.0
  %232 = vmatprep.subr.mxu0 0.0
  %233 = vmatpush1.msra.mxu0 0.0
  %234 = vmatprep.subr.mxu0 0.0
  %235 = vmatpush1.msra.mxu0 0.0
  %236 = vmatprep.subr.mxu0 0.0
  %237 = vmatpush1.msra.mxu0 0.0
  %238 = vmatprep.subr.mxu0 0.0
  %239 = vmatpush1.msra.mxu0 0.0
  %240 = vmatprep.subr.mxu0 0.0
  %241 = vmatpush1.msra.mxu0 0.0
  %242 = vmatprep.subr.mxu0 0.0
  %243 = vmatpush1.msra.mxu0 0.0
  %244 = vmatprep.subr.mxu0 0.0
  %245 = vmatpush1.msra.mxu0 0.0
  %246 = vmatprep.subr.mxu0 0.0
  %247 = vmatpush1.msra.mxu0 0.0
  %248 = vmatprep.subr.mxu0 0.0
  %249 = vmatpush1.msra.mxu0 0.0
  %250 = vmatprep.subr.mxu0 0.0
  %251 = vmatpush1.msra.mxu0 0.0
  %252 = vmatprep.subr.mxu0 0.0
  %253 = vmatpush1.msra.mxu0 0.0
  %254 = vmatprep.mubr.f32.mxu0 0.0
  %255 = vmatmul.mubr.f32.gmra.mrb[0].mxu0 %v188
  %v256 = vpop.f32.mrb[0].mxu0
  %v257 = vadd.f32 0.0, %v256
  %v258 = vpop.f32.mrb[0].mxu0
  %259 = vdwg.mxu0
  %v260 = vadd.f32 %v182, %v257
  %v261 = vxor.u32 %v260, 2147483648
  %v262 = vmul.f32 %v261, 1.442695
  %v263 = vpow.pop %v262
  %v264 = vadd.f32 %v263, 1.0
  %v265 = vrcp.pop %v264
  %v266 = vmul.f32 1.0, %v265
  %v267 = vtanh.pop %v260
  %v268 = vmul.f32 %v266, 0.0
  %270 = vrot.lane.b32.xlu0 %v267, 32
  %v271 = vpop.permute.xlu0 %270
  %v273 = vmul.f32 %v266, %v271
  %275 = vrot.lane.b32.xlu0 %v273, 32
  %v276 = vpop.permute.xlu0 %275
  %v278 = vadd.f32 %v268, %v276
  %v279 = vtanh.pop %v278
  %281 = vrot.lane.b32.xlu0 %v279, 32
  %v282 = vpop.permute.xlu0 %281
  %v284 = vmul.f32 %v266, %v282
  %286 = vrot.lane.b32.xlu0 %v284, 64
  %v287 = vpop.permute.xlu0 %286
  %v289 = vsel %vm31, %v287, 0.0
  %v290 = vld [vmem:[%s2] sm:$0xff]
  %v291 = vld [vmem:[%s2 + $0x8] sm:$0xff]
  %v292 = vld [vmem:[%s2 + $0x10] sm:$0xff]
  %v293 = vld [vmem:[%s2 + $0x18] sm:$0xff]
  %v294 = vld [vmem:[%s2 + $0x20] sm:$0xff]
  %v295 = vld [vmem:[%s2 + $0x28] sm:$0xff]
  %v296 = vld [vmem:[%s2 + $0x30] sm:$0xff]
  %v297 = vld [vmem:[%s2 + $0x38] sm:$0xff]
  %v298 = vld [vmem:[%s2 + $0x40] sm:$0xff]
  %v299 = vld [vmem:[%s2 + $0x48] sm:$0xff]
  %v300 = vld [vmem:[%s2 + $0x50] sm:$0xff]
  %v301 = vld [vmem:[%s2 + $0x58] sm:$0xff]
  %v302 = vld [vmem:[%s2 + $0x60] sm:$0xff]
  %v303 = vld [vmem:[%s2 + $0x68] sm:$0xff]
  %v304 = vld [vmem:[%s2 + $0x70] sm:$0xff]
  %v305 = vld [vmem:[%s2 + $0x78] sm:$0xff]
  %v306 = vld [vmem:[%s2 + $0x80] sm:$0xff]
  %v307 = vld [vmem:[%s2 + $0x88] sm:$0xff]
  %v308 = vld [vmem:[%s2 + $0x90] sm:$0xff]
  %v309 = vld [vmem:[%s2 + $0x98] sm:$0xff]
  %v310 = vld [vmem:[%s2 + $0xa0] sm:$0xff]
  %v311 = vld [vmem:[%s2 + $0xa8] sm:$0xff]
  %v312 = vld [vmem:[%s2 + $0xb0] sm:$0xff]
  %v313 = vld [vmem:[%s2 + $0xb8] sm:$0xff]
  %vm314 = vcmask 785408
  %v316 = vsel %vm314, %v289, 0
  %318 = vmatprep.subr.mxu0 %v291
  %319 = vmatpush1.msra.mxu0 %v290
  %320 = vmatprep.subr.mxu0 %v293
  %321 = vmatpush1.msra.mxu0 %v292
  %322 = vmatprep.subr.mxu0 %v295
  %323 = vmatpush1.msra.mxu0 %v294
  %324 = vmatprep.subr.mxu0 %v297
  %325 = vmatpush1.msra.mxu0 %v296
  %326 = vmatprep.subr.mxu0 %v299
  %327 = vmatpush1.msra.mxu0 %v298
  %328 = vmatprep.subr.mxu0 %v301
  %329 = vmatpush1.msra.mxu0 %v300
  %330 = vmatprep.subr.mxu0 %v303
  %331 = vmatpush1.msra.mxu0 %v302
  %332 = vmatprep.subr.mxu0 %v305
  %333 = vmatpush1.msra.mxu0 %v304
  %334 = vmatprep.subr.mxu0 %v307
  %335 = vmatpush1.msra.mxu0 %v306
  %336 = vmatprep.subr.mxu0 %v309
  %337 = vmatpush1.msra.mxu0 %v308
  %338 = vmatprep.subr.mxu0 %v311
  %339 = vmatpush1.msra.mxu0 %v310
  %340 = vmatprep.subr.mxu0 %v313
  %341 = vmatpush1.msra.mxu0 %v312
  %342 = vmatprep.subr.mxu0 0.0
  %343 = vmatpush1.msra.mxu0 0.0
  %344 = vmatprep.subr.mxu0 0.0
  %345 = vmatpush1.msra.mxu0 0.0
  %346 = vmatprep.subr.mxu0 0.0
  %347 = vmatpush1.msra.mxu0 0.0
  %348 = vmatprep.subr.mxu0 0.0
  %349 = vmatpush1.msra.mxu0 0.0
  %350 = vmatprep.subr.mxu0 0.0
  %351 = vmatpush1.msra.mxu0 0.0
  %352 = vmatprep.subr.mxu0 0.0
  %353 = vmatpush1.msra.mxu0 0.0
  %354 = vmatprep.subr.mxu0 0.0
  %355 = vmatpush1.msra.mxu0 0.0
  %356 = vmatprep.subr.mxu0 0.0
  %357 = vmatpush1.msra.mxu0 0.0
  %358 = vmatprep.subr.mxu0 0.0
  %359 = vmatpush1.msra.mxu0 0.0
  %360 = vmatprep.subr.mxu0 0.0
  %361 = vmatpush1.msra.mxu0 0.0
  %362 = vmatprep.subr.mxu0 0.0
  %363 = vmatpush1.msra.mxu0 0.0
  %364 = vmatprep.subr.mxu0 0.0
  %365 = vmatpush1.msra.mxu0 0.0
  %366 = vmatprep.subr.mxu0 0.0
  %367 = vmatpush1.msra.mxu0 0.0
  %368 = vmatprep.subr.mxu0 0.0
  %369 = vmatpush1.msra.mxu0 0.0
  %370 = vmatprep.subr.mxu0 0.0
  %371 = vmatpush1.msra.mxu0 0.0
  %372 = vmatprep.subr.mxu0 0.0
  %373 = vmatpush1.msra.mxu0 0.0
  %374 = vmatprep.subr.mxu0 0.0
  %375 = vmatpush1.msra.mxu0 0.0
  %376 = vmatprep.subr.mxu0 0.0
  %377 = vmatpush1.msra.mxu0 0.0
  %378 = vmatprep.subr.mxu0 0.0
  %379 = vmatpush1.msra.mxu0 0.0
  %380 = vmatprep.subr.mxu0 0.0
  %381 = vmatpush1.msra.mxu0 0.0
  %382 = vmatprep.mubr.f32.mxu0 0.0
  %383 = vmatmul.mubr.f32.gmra.mrb[0].mxu0 %v316
  %v384 = vpop.f32.mrb[0].mxu0
  %v385 = vadd.f32 %v175, %v384
  %v386 = vpop.f32.mrb[0].mxu0
  %v387 = vadd.f32 %v179, %v386
  %388 = vdwg.mxu0
  %v389 = vxor.u32 %v385, 2147483648
  %v390 = vxor.u32 %v387, 2147483648
  %v391 = vmul.f32 %v389, 1.442695
  %v392 = vpow.pop %v391
  %v393 = vmul.f32 %v390, 1.442695
  %v394 = vpow.pop %v393
  %v395 = vadd.f32 %v392, 1.0
  %v396 = vadd.f32 %v394, 1.0
  %v397 = vrcp.pop %v395
  %v398 = vmul.f32 1.0, %v397
  %v399 = vrcp.pop %v396
  %v400 = vmul.f32 1.0, %v399
  %v401 = vtanh.pop %v387
  %v402 = vmul.f32 %v398, 0.0
  %404 = vrot.lane.b32.xlu0 %v401, 64
  %v405 = vpop.permute.xlu0 %404
  %v407 = vmul.f32 %v398, %v405
  %409 = vrot.lane.b32.xlu0 %v407, 64
  %v410 = vpop.permute.xlu0 %409
  %v412 = vadd.f32 %v402, %v410
  %v413 = vtanh.pop %v412
  %415 = vrot.lane.b32.xlu0 %v413, 64
  %v416 = vpop.permute.xlu0 %415
  %v418 = vmul.f32 %v400, %v416
  %vm419 = vcmask 523264
  %420 = vst.msk [vmem:[#allocation3] sm:$0xff] %vm419, %v418
  %v421 = vld [vmem:[#allocation2 + $0x8] sm:$0xff]
  %v422 = vld [vmem:[%s1 + $0x20] sm:$0xff]
  %v423 = vld [vmem:[%s1 + $0x28] sm:$0xff]
  %v424 = vld [vmem:[%s1 + $0x30] sm:$0xff]
  %v425 = vld [vmem:[%s1 + $0x38] sm:$0xff]
  %v426 = vsel %vm31, %v287, 0
  %428 = vmatprep.subr.mxu0 0.0
  %429 = vmatpush1.msra.mxu0 %v422
  %430 = vmatprep.subr.mxu0 0.0
  %431 = vmatpush1.msra.mxu0 %v423
  %432 = vmatprep.subr.mxu0 0.0
  %433 = vmatpush1.msra.mxu0 %v424
  %434 = vmatprep.subr.mxu0 0.0
  %435 = vmatpush1.msra.mxu0 %v425
  %436 = vmatprep.subr.mxu0 0.0
  %437 = vmatpush1.msra.mxu0 0.0
  %438 = vmatprep.subr.mxu0 0.0
  %439 = vmatpush1.msra.mxu0 0.0
  %440 = vmatprep.subr.mxu0 0.0
  %441 = vmatpush1.msra.mxu0 0.0
  %442 = vmatprep.subr.mxu0 0.0
  %443 = vmatpush1.msra.mxu0 0.0
  %444 = vmatprep.subr.mxu0 0.0
  %445 = vmatpush1.msra.mxu0 0.0
  %446 = vmatprep.subr.mxu0 0.0
  %447 = vmatpush1.msra.mxu0 0.0
  %448 = vmatprep.subr.mxu0 0.0
  %449 = vmatpush1.msra.mxu0 0.0
  %450 = vmatprep.subr.mxu0 0.0
  %451 = vmatpush1.msra.mxu0 0.0
  %452 = vmatprep.subr.mxu0 0.0
  %453 = vmatpush1.msra.mxu0 0.0
  %454 = vmatprep.subr.mxu0 0.0
  %455 = vmatpush1.msra.mxu0 0.0
  %456 = vmatprep.subr.mxu0 0.0
  %457 = vmatpush1.msra.mxu0 0.0
  %458 = vmatprep.subr.mxu0 0.0
  %459 = vmatpush1.msra.mxu0 0.0
  %460 = vmatprep.subr.mxu0 0.0
  %461 = vmatpush1.msra.mxu0 0.0
  %462 = vmatprep.subr.mxu0 0.0
  %463 = vmatpush1.msra.mxu0 0.0
  %464 = vmatprep.subr.mxu0 0.0
  %465 = vmatpush1.msra.mxu0 0.0
  %466 = vmatprep.subr.mxu0 0.0
  %467 = vmatpush1.msra.mxu0 0.0
  %468 = vmatprep.subr.mxu0 0.0
  %469 = vmatpush1.msra.mxu0 0.0
  %470 = vmatprep.subr.mxu0 0.0
  %471 = vmatpush1.msra.mxu0 0.0
  %472 = vmatprep.subr.mxu0 0.0
  %473 = vmatpush1.msra.mxu0 0.0
  %474 = vmatprep.subr.mxu0 0.0
  %475 = vmatpush1.msra.mxu0 0.0
  %476 = vmatprep.subr.mxu0 0.0
  %477 = vmatpush1.msra.mxu0 0.0
  %478 = vmatprep.subr.mxu0 0.0
  %479 = vmatpush1.msra.mxu0 0.0
  %480 = vmatprep.subr.mxu0 0.0
  %481 = vmatpush1.msra.mxu0 0.0
  %482 = vmatprep.subr.mxu0 0.0
  %483 = vmatpush1.msra.mxu0 0.0
  %484 = vmatprep.subr.mxu0 0.0
  %485 = vmatpush1.msra.mxu0 0.0
  %486 = vmatprep.subr.mxu0 0.0
  %487 = vmatpush1.msra.mxu0 0.0
  %488 = vmatprep.subr.mxu0 0.0
  %489 = vmatpush1.msra.mxu0 0.0
  %490 = vmatprep.subr.mxu0 0.0
  %491 = vmatpush1.msra.mxu0 0.0
  %492 = vmatprep.mubr.f32.mxu0 0.0
  %493 = vmatmul.mubr.f32.gmra.mrb[0].mxu0 %v426
  %v494 = vpop.f32.mrb[0].mxu0
  %v495 = vadd.f32 0.0, %v494
  %v496 = vpop.f32.mrb[0].mxu0
  %497 = vdwg.mxu0
  %v498 = vadd.f32 %v421, %v495
  %v499 = vxor.u32 %v498, 2147483648
  %v500 = vmul.f32 %v499, 1.442695
  %v501 = vpow.pop %v500
  %v502 = vadd.f32 %v501, 1.0
  %v503 = vrcp.pop %v502
  %v504 = vmul.f32 1.0, %v503
  %v505 = vtanh.pop %v498
  %v506 = vmul.f32 %v504, %v278
  %508 = vrot.lane.b32.xlu0 %v505, 32
  %v509 = vpop.permute.xlu0 %508
  %v511 = vmul.f32 %v504, %v509
  %513 = vrot.lane.b32.xlu0 %v511, 32
  %v514 = vpop.permute.xlu0 %513
  %v516 = vadd.f32 %v506, %v514
  %v517 = vtanh.pop %v516
  %519 = vrot.lane.b32.xlu0 %v517, 32
  %v520 = vpop.permute.xlu0 %519
  %v522 = vmul.f32 %v504, %v520
  %524 = vrot.lane.b32.xlu0 %v522, 64
  %v525 = vpop.permute.xlu0 %524
  %528 = vrot.lane.b32.xlu0 %v418, 32
  %v529 = vpop.permute.xlu0 %528
  %v531 = vsel %vm31, %v525, %v529
  %v532 = vld [vmem:[%s2] sm:$0xff]
  %v533 = vld [vmem:[%s2 + $0x8] sm:$0xff]
  %v534 = vld [vmem:[%s2 + $0x10] sm:$0xff]
  %v535 = vld [vmem:[%s2 + $0x18] sm:$0xff]
  %v536 = vld [vmem:[%s2 + $0x20] sm:$0xff]
  %v537 = vld [vmem:[%s2 + $0x28] sm:$0xff]
  %v538 = vld [vmem:[%s2 + $0x30] sm:$0xff]
  %v539 = vld [vmem:[%s2 + $0x38] sm:$0xff]
  %v540 = vld [vmem:[%s2 + $0x40] sm:$0xff]
  %v541 = vld [vmem:[%s2 + $0x48] sm:$0xff]
  %v542 = vld [vmem:[%s2 + $0x50] sm:$0xff]
  %v543 = vld [vmem:[%s2 + $0x58] sm:$0xff]
  %v544 = vld [vmem:[%s2 + $0x60] sm:$0xff]
  %v545 = vld [vmem:[%s2 + $0x68] sm:$0xff]
  %v546 = vld [vmem:[%s2 + $0x70] sm:$0xff]
  %v547 = vld [vmem:[%s2 + $0x78] sm:$0xff]
  %v548 = vld [vmem:[%s2 + $0x80] sm:$0xff]
  %v549 = vld [vmem:[%s2 + $0x88] sm:$0xff]
  %v550 = vld [vmem:[%s2 + $0x90] sm:$0xff]
  %v551 = vld [vmem:[%s2 + $0x98] sm:$0xff]
  %v552 = vld [vmem:[%s2 + $0xa0] sm:$0xff]
  %v553 = vld [vmem:[%s2 + $0xa8] sm:$0xff]
  %v554 = vld [vmem:[%s2 + $0xb0] sm:$0xff]
  %v555 = vld [vmem:[%s2 + $0xb8] sm:$0xff]
  %v557 = vsel %vm314, %v531, 0
  %559 = vmatprep.subr.mxu0 %v533
  %560 = vmatpush1.msra.mxu0 %v532
  %561 = vmatprep.subr.mxu0 %v535
  %562 = vmatpush1.msra.mxu0 %v534
  %563 = vmatprep.subr.mxu0 %v537
  %564 = vmatpush1.msra.mxu0 %v536
  %565 = vmatprep.subr.mxu0 %v539
  %566 = vmatpush1.msra.mxu0 %v538
  %567 = vmatprep.subr.mxu0 %v541
  %568 = vmatpush1.msra.mxu0 %v540
  %569 = vmatprep.subr.mxu0 %v543
  %570 = vmatpush1.msra.mxu0 %v542
  %571 = vmatprep.subr.mxu0 %v545
  %572 = vmatpush1.msra.mxu0 %v544
  %573 = vmatprep.subr.mxu0 %v547
  %574 = vmatpush1.msra.mxu0 %v546
  %575 = vmatprep.subr.mxu0 %v549
  %576 = vmatpush1.msra.mxu0 %v548
  %577 = vmatprep.subr.mxu0 %v551
  %578 = vmatpush1.msra.mxu0 %v550
  %579 = vmatprep.subr.mxu0 %v553
  %580 = vmatpush1.msra.mxu0 %v552
  %581 = vmatprep.subr.mxu0 %v555
  %582 = vmatpush1.msra.mxu0 %v554
  %583 = vmatprep.subr.mxu0 0.0
  %584 = vmatpush1.msra.mxu0 0.0
  %585 = vmatprep.subr.mxu0 0.0
  %586 = vmatpush1.msra.mxu0 0.0
  %587 = vmatprep.subr.mxu0 0.0
  %588 = vmatpush1.msra.mxu0 0.0
  %589 = vmatprep.subr.mxu0 0.0
  %590 = vmatpush1.msra.mxu0 0.0
  %591 = vmatprep.subr.mxu0 0.0
  %592 = vmatpush1.msra.mxu0 0.0
  %593 = vmatprep.subr.mxu0 0.0
  %594 = vmatpush1.msra.mxu0 0.0
  %595 = vmatprep.subr.mxu0 0.0
  %596 = vmatpush1.msra.mxu0 0.0
  %597 = vmatprep.subr.mxu0 0.0
  %598 = vmatpush1.msra.mxu0 0.0
  %599 = vmatprep.subr.mxu0 0.0
  %600 = vmatpush1.msra.mxu0 0.0
  %601 = vmatprep.subr.mxu0 0.0
  %602 = vmatpush1.msra.mxu0 0.0
  %603 = vmatprep.subr.mxu0 0.0
  %604 = vmatpush1.msra.mxu0 0.0
  %605 = vmatprep.subr.mxu0 0.0
  %606 = vmatpush1.msra.mxu0 0.0
  %607 = vmatprep.subr.mxu0 0.0
  %608 = vmatpush1.msra.mxu0 0.0
  %609 = vmatprep.subr.mxu0 0.0
  %610 = vmatpush1.msra.mxu0 0.0
  %611 = vmatprep.subr.mxu0 0.0
  %612 = vmatpush1.msra.mxu0 0.0
  %613 = vmatprep.subr.mxu0 0.0
  %614 = vmatpush1.msra.mxu0 0.0
  %615 = vmatprep.subr.mxu0 0.0
  %616 = vmatpush1.msra.mxu0 0.0
  %617 = vmatprep.subr.mxu0 0.0
  %618 = vmatpush1.msra.mxu0 0.0
  %619 = vmatprep.subr.mxu0 0.0
  %620 = vmatpush1.msra.mxu0 0.0
  %621 = vmatprep.subr.mxu0 0.0
  %622 = vmatpush1.msra.mxu0 0.0
  %623 = vmatprep.mubr.f32.mxu0 0.0
  %624 = vmatmul.mubr.f32.gmra.mrb[0].mxu0 %v557
  %v625 = vpop.f32.mrb[0].mxu0
  %v626 = vadd.f32 %v175, %v625
  %v627 = vpop.f32.mrb[0].mxu0
  %v628 = vadd.f32 %v179, %v627
  %629 = vdwg.mxu0
  %v630 = vxor.u32 %v626, 2147483648
  %v631 = vxor.u32 %v628, 2147483648
  %v632 = vmul.f32 %v630, 1.442695
  %v633 = vpow.pop %v632
  %v634 = vmul.f32 %v631, 1.442695
  %v635 = vpow.pop %v634
  %v636 = vadd.f32 %v633, 1.0
  %v637 = vadd.f32 %v635, 1.0
  %v638 = vrcp.pop %v636
  %v639 = vmul.f32 1.0, %v638
  %v640 = vrcp.pop %v637
  %v641 = vmul.f32 1.0, %v640
  %v642 = vtanh.pop %v628
  %v643 = vmul.f32 %v639, %v412
  %645 = vrot.lane.b32.xlu0 %v642, 64
  %v646 = vpop.permute.xlu0 %645
  %v648 = vmul.f32 %v639, %v646
  %650 = vrot.lane.b32.xlu0 %v648, 64
  %v651 = vpop.permute.xlu0 %650
  %v653 = vadd.f32 %v643, %v651
  %v654 = vtanh.pop %v653
  %656 = vrot.lane.b32.xlu0 %v654, 64
  %v657 = vpop.permute.xlu0 %656
  %v659 = vmul.f32 %v641, %v657
  %660 = vst.msk [vmem:[#allocation3 + $0x8] sm:$0xff] %vm419, %v659
  %v661 = vld [vmem:[#allocation2 + $0x10] sm:$0xff]
  %v662 = vld [vmem:[%s1 + $0x20] sm:$0xff]
  %v663 = vld [vmem:[%s1 + $0x28] sm:$0xff]
  %v664 = vld [vmem:[%s1 + $0x30] sm:$0xff]
  %v665 = vld [vmem:[%s1 + $0x38] sm:$0xff]
  %v666 = vsel %vm31, %v525, 0
  %668 = vmatprep.subr.mxu0 0.0
  %669 = vmatpush1.msra.mxu0 %v662
  %670 = vmatprep.subr.mxu0 0.0
  %671 = vmatpush1.msra.mxu0 %v663
  %672 = vmatprep.subr.mxu0 0.0
  %673 = vmatpush1.msra.mxu0 %v664
  %674 = vmatprep.subr.mxu0 0.0
  %675 = vmatpush1.msra.mxu0 %v665
  %676 = vmatprep.subr.mxu0 0.0
  %677 = vmatpush1.msra.mxu0 0.0
  %678 = vmatprep.subr.mxu0 0.0
  %679 = vmatpush1.msra.mxu0 0.0
  %680 = vmatprep.subr.mxu0 0.0
  %681 = vmatpush1.msra.mxu0 0.0
  %682 = vmatprep.subr.mxu0 0.0
  %683 = vmatpush1.msra.mxu0 0.0
  %684 = vmatprep.subr.mxu0 0.0
  %685 = vmatpush1.msra.mxu0 0.0
  %686 = vmatprep.subr.mxu0 0.0
  %687 = vmatpush1.msra.mxu0 0.0
  %688 = vmatprep.subr.mxu0 0.0
  %689 = vmatpush1.msra.mxu0 0.0
  %690 = vmatprep.subr.mxu0 0.0
  %691 = vmatpush1.msra.mxu0 0.0
  %692 = vmatprep.subr.mxu0 0.0
  %693 = vmatpush1.msra.mxu0 0.0
  %694 = vmatprep.subr.mxu0 0.0
  %695 = vmatpush1.msra.mxu0 0.0
  %696 = vmatprep.subr.mxu0 0.0
  %697 = vmatpush1.msra.mxu0 0.0
  %698 = vmatprep.subr.mxu0 0.0
  %699 = vmatpush1.msra.mxu0 0.0
  %700 = vmatprep.subr.mxu0 0.0
  %701 = vmatpush1.msra.mxu0 0.0
  %702 = vmatprep.subr.mxu0 0.0
  %703 = vmatpush1.msra.mxu0 0.0
  %704 = vmatprep.subr.mxu0 0.0
  %705 = vmatpush1.msra.mxu0 0.0
  %706 = vmatprep.subr.mxu0 0.0
  %707 = vmatpush1.msra.mxu0 0.0
  %708 = vmatprep.subr.mxu0 0.0
  %709 = vmatpush1.msra.mxu0 0.0
  %710 = vmatprep.subr.mxu0 0.0
  %711 = vmatpush1.msra.mxu0 0.0
  %712 = vmatprep.subr.mxu0 0.0
  %713 = vmatpush1.msra.mxu0 0.0
  %714 = vmatprep.subr.mxu0 0.0
  %715 = vmatpush1.msra.mxu0 0.0
  %716 = vmatprep.subr.mxu0 0.0
  %717 = vmatpush1.msra.mxu0 0.0
  %718 = vmatprep.subr.mxu0 0.0
  %719 = vmatpush1.msra.mxu0 0.0
  %720 = vmatprep.subr.mxu0 0.0
  %721 = vmatpush1.msra.mxu0 0.0
  %722 = vmatprep.subr.mxu0 0.0
  %723 = vmatpush1.msra.mxu0 0.0
  %724 = vmatprep.subr.mxu0 0.0
  %725 = vmatpush1.msra.mxu0 0.0
  %726 = vmatprep.subr.mxu0 0.0
  %727 = vmatpush1.msra.mxu0 0.0
  %728 = vmatprep.subr.mxu0 0.0
  %729 = vmatpush1.msra.mxu0 0.0
  %730 = vmatprep.subr.mxu0 0.0
  %731 = vmatpush1.msra.mxu0 0.0
  %732 = vmatprep.mubr.f32.mxu0 0.0
  %733 = vmatmul.mubr.f32.gmra.mrb[0].mxu0 %v666
  %v734 = vpop.f32.mrb[0].mxu0
  %v735 = vadd.f32 0.0, %v734
  %v736 = vpop.f32.mrb[0].mxu0
  %737 = vdwg.mxu0
  %v738 = vadd.f32 %v661, %v735
  %v739 = vxor.u32 %v738, 2147483648
  %v740 = vmul.f32 %v739, 1.442695
  %v741 = vpow.pop %v740
  %v742 = vadd.f32 %v741, 1.0
  %v743 = vrcp.pop %v742
  %v744 = vmul.f32 1.0, %v743
  %v745 = vtanh.pop %v738
  %v746 = vmul.f32 %v744, %v516
  %748 = vrot.lane.b32.xlu0 %v745, 32
  %v749 = vpop.permute.xlu0 %748
  %v751 = vmul.f32 %v744, %v749
  %753 = vrot.lane.b32.xlu0 %v751, 32
  %v754 = vpop.permute.xlu0 %753
  %v756 = vadd.f32 %v746, %v754
  %v757 = vtanh.pop %v756
  %759 = vrot.lane.b32.xlu0 %v757, 32
  %v760 = vpop.permute.xlu0 %759
  %v762 = vmul.f32 %v744, %v760
  %764 = vrot.lane.b32.xlu0 %v762, 64
  %v765 = vpop.permute.xlu0 %764
  %768 = vrot.lane.b32.xlu0 %v659, 32
  %v769 = vpop.permute.xlu0 %768
  %v771 = vsel %vm31, %v765, %v769
  %v772 = vld [vmem:[%s2] sm:$0xff]
  %v773 = vld [vmem:[%s2 + $0x8] sm:$0xff]
  %v774 = vld [vmem:[%s2 + $0x10] sm:$0xff]
  %v775 = vld [vmem:[%s2 + $0x18] sm:$0xff]
  %v776 = vld [vmem:[%s2 + $0x20] sm:$0xff]
  %v777 = vld [vmem:[%s2 + $0x28] sm:$0xff]
  %v778 = vld [vmem:[%s2 + $0x30] sm:$0xff]
  %v779 = vld [vmem:[%s2 + $0x38] sm:$0xff]
  %v780 = vld [vmem:[%s2 + $0x40] sm:$0xff]
  %v781 = vld [vmem:[%s2 + $0x48] sm:$0xff]
  %v782 = vld [vmem:[%s2 + $0x50] sm:$0xff]
  %v783 = vld [vmem:[%s2 + $0x58] sm:$0xff]
  %v784 = vld [vmem:[%s2 + $0x60] sm:$0xff]
  %v785 = vld [vmem:[%s2 + $0x68] sm:$0xff]
  %v786 = vld [vmem:[%s2 + $0x70] sm:$0xff]
  %v787 = vld [vmem:[%s2 + $0x78] sm:$0xff]
  %v788 = vld [vmem:[%s2 + $0x80] sm:$0xff]
  %v789 = vld [vmem:[%s2 + $0x88] sm:$0xff]
  %v790 = vld [vmem:[%s2 + $0x90] sm:$0xff]
  %v791 = vld [vmem:[%s2 + $0x98] sm:$0xff]
  %v792 = vld [vmem:[%s2 + $0xa0] sm:$0xff]
  %v793 = vld [vmem:[%s2 + $0xa8] sm:$0xff]
  %v794 = vld [vmem:[%s2 + $0xb0] sm:$0xff]
  %v795 = vld [vmem:[%s2 + $0xb8] sm:$0xff]
  %v797 = vsel %vm314, %v771, 0
  %799 = vmatprep.subr.mxu0 %v773
  %800 = vmatpush1.msra.mxu0 %v772
  %801 = vmatprep.subr.mxu0 %v775
  %802 = vmatpush1.msra.mxu0 %v774
  %803 = vmatprep.subr.mxu0 %v777
  %804 = vmatpush1.msra.mxu0 %v776
  %805 = vmatprep.subr.mxu0 %v779
  %806 = vmatpush1.msra.mxu0 %v778
  %807 = vmatprep.subr.mxu0 %v781
  %808 = vmatpush1.msra.mxu0 %v780
  %809 = vmatprep.subr.mxu0 %v783
  %810 = vmatpush1.msra.mxu0 %v782
  %811 = vmatprep.subr.mxu0 %v785
  %812 = vmatpush1.msra.mxu0 %v784
  %813 = vmatprep.subr.mxu0 %v787
  %814 = vmatpush1.msra.mxu0 %v786
  %815 = vmatprep.subr.mxu0 %v789
  %816 = vmatpush1.msra.mxu0 %v788
  %817 = vmatprep.subr.mxu0 %v791
  %818 = vmatpush1.msra.mxu0 %v790
  %819 = vmatprep.subr.mxu0 %v793
  %820 = vmatpush1.msra.mxu0 %v792
  %821 = vmatprep.subr.mxu0 %v795
  %822 = vmatpush1.msra.mxu0 %v794
  %823 = vmatprep.subr.mxu0 0.0
  %824 = vmatpush1.msra.mxu0 0.0
  %825 = vmatprep.subr.mxu0 0.0
  %826 = vmatpush1.msra.mxu0 0.0
  %827 = vmatprep.subr.mxu0 0.0
  %828 = vmatpush1.msra.mxu0 0.0
  %829 = vmatprep.subr.mxu0 0.0
  %830 = vmatpush1.msra.mxu0 0.0
  %831 = vmatprep.subr.mxu0 0.0
  %832 = vmatpush1.msra.mxu0 0.0
  %833 = vmatprep.subr.mxu0 0.0
  %834 = vmatpush1.msra.mxu0 0.0
  %835 = vmatprep.subr.mxu0 0.0
  %836 = vmatpush1.msra.mxu0 0.0
  %837 = vmatprep.subr.mxu0 0.0
  %838 = vmatpush1.msra.mxu0 0.0
  %839 = vmatprep.subr.mxu0 0.0
  %840 = vmatpush1.msra.mxu0 0.0
  %841 = vmatprep.subr.mxu0 0.0
  %842 = vmatpush1.msra.mxu0 0.0
  %843 = vmatprep.subr.mxu0 0.0
  %844 = vmatpush1.msra.mxu0 0.0
  %845 = vmatprep.subr.mxu0 0.0
  %846 = vmatpush1.msra.mxu0 0.0
  %847 = vmatprep.subr.mxu0 0.0
  %848 = vmatpush1.msra.mxu0 0.0
  %849 = vmatprep.subr.mxu0 0.0
  %850 = vmatpush1.msra.mxu0 0.0
  %851 = vmatprep.subr.mxu0 0.0
  %852 = vmatpush1.msra.mxu0 0.0
  %853 = vmatprep.subr.mxu0 0.0
  %854 = vmatpush1.msra.mxu0 0.0
  %855 = vmatprep.subr.mxu0 0.0
  %856 = vmatpush1.msra.mxu0 0.0
  %857 = vmatprep.subr.mxu0 0.0
  %858 = vmatpush1.msra.mxu0 0.0
  %859 = vmatprep.subr.mxu0 0.0
  %860 = vmatpush1.msra.mxu0 0.0
  %861 = vmatprep.subr.mxu0 0.0
  %862 = vmatpush1.msra.mxu0 0.0
  %863 = vmatprep.mubr.f32.mxu0 0.0
  %864 = vmatmul.mubr.f32.gmra.mrb[0].mxu0 %v797
  %v865 = vpop.f32.mrb[0].mxu0
  %v866 = vadd.f32 %v175, %v865
  %v867 = vpop.f32.mrb[0].mxu0
  %v868 = vadd.f32 %v179, %v867
  %869 = vdwg.mxu0
  %v870 = vxor.u32 %v866, 2147483648
  %v871 = vxor.u32 %v868, 2147483648
  %v872 = vmul.f32 %v870, 1.442695
  %v873 = vpow.pop %v872
  %v874 = vmul.f32 %v871, 1.442695
  %v875 = vpow.pop %v874
  %v876 = vadd.f32 %v873, 1.0
  %v877 = vadd.f32 %v875, 1.0
  %v878 = vrcp.pop %v876
  %v879 = vmul.f32 1.0, %v878
  %v880 = vrcp.pop %v877
  %v881 = vmul.f32 1.0, %v880
  %v882 = vtanh.pop %v868
  %v883 = vmul.f32 %v879, %v653
  %885 = vrot.lane.b32.xlu0 %v882, 64
  %v886 = vpop.permute.xlu0 %885
  %v888 = vmul.f32 %v879, %v886
  %890 = vrot.lane.b32.xlu0 %v888, 64
  %v891 = vpop.permute.xlu0 %890
  %v893 = vadd.f32 %v883, %v891
  %v894 = vtanh.pop %v893
  %896 = vrot.lane.b32.xlu0 %v894, 64
  %v897 = vpop.permute.xlu0 %896
  %v899 = vmul.f32 %v881, %v897
  %900 = vst.msk [vmem:[#allocation3 + $0x10] sm:$0xff] %vm419, %v899
  %v901 = vld [vmem:[#allocation2 + $0x18] sm:$0xff]
  %v902 = vld [vmem:[%s1 + $0x20] sm:$0xff]
  %v903 = vld [vmem:[%s1 + $0x28] sm:$0xff]
  %v904 = vld [vmem:[%s1 + $0x30] sm:$0xff]
  %v905 = vld [vmem:[%s1 + $0x38] sm:$0xff]
  %v906 = vsel %vm31, %v765, 0
  %908 = vmatprep.subr.mxu0 0.0
  %909 = vmatpush1.msra.mxu0 %v902
  %910 = vmatprep.subr.mxu0 0.0
  %911 = vmatpush1.msra.mxu0 %v903
  %912 = vmatprep.subr.mxu0 0.0
  %913 = vmatpush1.msra.mxu0 %v904
  %914 = vmatprep.subr.mxu0 0.0
  %915 = vmatpush1.msra.mxu0 %v905
  %916 = vmatprep.subr.mxu0 0.0
  %917 = vmatpush1.msra.mxu0 0.0
  %918 = vmatprep.subr.mxu0 0.0
  %919 = vmatpush1.msra.mxu0 0.0
  %920 = vmatprep.subr.mxu0 0.0
  %921 = vmatpush1.msra.mxu0 0.0
  %922 = vmatprep.subr.mxu0 0.0
  %923 = vmatpush1.msra.mxu0 0.0
  %924 = vmatprep.subr.mxu0 0.0
  %925 = vmatpush1.msra.mxu0 0.0
  %926 = vmatprep.subr.mxu0 0.0
  %927 = vmatpush1.msra.mxu0 0.0
  %928 = vmatprep.subr.mxu0 0.0
  %929 = vmatpush1.msra.mxu0 0.0
  %930 = vmatprep.subr.mxu0 0.0
  %931 = vmatpush1.msra.mxu0 0.0
  %932 = vmatprep.subr.mxu0 0.0
  %933 = vmatpush1.msra.mxu0 0.0
  %934 = vmatprep.subr.mxu0 0.0
  %935 = vmatpush1.msra.mxu0 0.0
  %936 = vmatprep.subr.mxu0 0.0
  %937 = vmatpush1.msra.mxu0 0.0
  %938 = vmatprep.subr.mxu0 0.0
  %939 = vmatpush1.msra.mxu0 0.0
  %940 = vmatprep.subr.mxu0 0.0
  %941 = vmatpush1.msra.mxu0 0.0
  %942 = vmatprep.subr.mxu0 0.0
  %943 = vmatpush1.msra.mxu0 0.0
  %944 = vmatprep.subr.mxu0 0.0
  %945 = vmatpush1.msra.mxu0 0.0
  %946 = vmatprep.subr.mxu0 0.0
  %947 = vmatpush1.msra.mxu0 0.0
  %948 = vmatprep.subr.mxu0 0.0
  %949 = vmatpush1.msra.mxu0 0.0
  %950 = vmatprep.subr.mxu0 0.0
  %951 = vmatpush1.msra.mxu0 0.0
  %952 = vmatprep.subr.mxu0 0.0
  %953 = vmatpush1.msra.mxu0 0.0
  %954 = vmatprep.subr.mxu0 0.0
  %955 = vmatpush1.msra.mxu0 0.0
  %956 = vmatprep.subr.mxu0 0.0
  %957 = vmatpush1.msra.mxu0 0.0
  %958 = vmatprep.subr.mxu0 0.0
  %959 = vmatpush1.msra.mxu0 0.0
  %960 = vmatprep.subr.mxu0 0.0
  %961 = vmatpush1.msra.mxu0 0.0
  %962 = vmatprep.subr.mxu0 0.0
  %963 = vmatpush1.msra.mxu0 0.0
  %964 = vmatprep.subr.mxu0 0.0
  %965 = vmatpush1.msra.mxu0 0.0
  %966 = vmatprep.subr.mxu0 0.0
  %967 = vmatpush1.msra.mxu0 0.0
  %968 = vmatprep.subr.mxu0 0.0
  %969 = vmatpush1.msra.mxu0 0.0
  %970 = vmatprep.subr.mxu0 0.0
  %971 = vmatpush1.msra.mxu0 0.0
  %972 = vmatprep.mubr.f32.mxu0 0.0
  %973 = vmatmul.mubr.f32.gmra.mrb[0].mxu0 %v906
  %v974 = vpop.f32.mrb[0].mxu0
  %v975 = vadd.f32 0.0, %v974
  %v976 = vpop.f32.mrb[0].mxu0
  %977 = vdwg.mxu0
  %v978 = vadd.f32 %v901, %v975
  %v979 = vxor.u32 %v978, 2147483648
  %v980 = vmul.f32 %v979, 1.442695
  %v981 = vpow.pop %v980
  %v982 = vadd.f32 %v981, 1.0
  %v983 = vrcp.pop %v982
  %v984 = vmul.f32 1.0, %v983
  %v985 = vtanh.pop %v978
  %v986 = vmul.f32 %v984, %v756
  %988 = vrot.lane.b32.xlu0 %v985, 32
  %v989 = vpop.permute.xlu0 %988
  %v991 = vmul.f32 %v984, %v989
  %993 = vrot.lane.b32.xlu0 %v991, 32
  %v994 = vpop.permute.xlu0 %993
  %v996 = vadd.f32 %v986, %v994
  %v997 = vtanh.pop %v996
  %999 = vrot.lane.b32.xlu0 %v997, 32
  %v1000 = vpop.permute.xlu0 %999
  %v1002 = vmul.f32 %v984, %v1000
  %1004 = vrot.lane.b32.xlu0 %v1002, 64
  %v1005 = vpop.permute.xlu0 %1004
  %1008 = vrot.lane.b32.xlu0 %v899, 32
  %v1009 = vpop.permute.xlu0 %1008
  %v1011 = vsel %vm31, %v1005, %v1009
  %v1012 = vld [vmem:[%s2] sm:$0xff]
  %v1013 = vld [vmem:[%s2 + $0x8] sm:$0xff]
  %v1014 = vld [vmem:[%s2 + $0x10] sm:$0xff]
  %v1015 = vld [vmem:[%s2 + $0x18] sm:$0xff]
  %v1016 = vld [vmem:[%s2 + $0x20] sm:$0xff]
  %v1017 = vld [vmem:[%s2 + $0x28] sm:$0xff]
  %v1018 = vld [vmem:[%s2 + $0x30] sm:$0xff]
  %v1019 = vld [vmem:[%s2 + $0x38] sm:$0xff]
  %v1020 = vld [vmem:[%s2 + $0x40] sm:$0xff]
  %v1021 = vld [vmem:[%s2 + $0x48] sm:$0xff]
  %v1022 = vld [vmem:[%s2 + $0x50] sm:$0xff]
  %v1023 = vld [vmem:[%s2 + $0x58] sm:$0xff]
  %v1024 = vld [vmem:[%s2 + $0x60] sm:$0xff]
  %v1025 = vld [vmem:[%s2 + $0x68] sm:$0xff]
  %v1026 = vld [vmem:[%s2 + $0x70] sm:$0xff]
  %v1027 = vld [vmem:[%s2 + $0x78] sm:$0xff]
  %v1028 = vld [vmem:[%s2 + $0x80] sm:$0xff]
  %v1029 = vld [vmem:[%s2 + $0x88] sm:$0xff]
  %v1030 = vld [vmem:[%s2 + $0x90] sm:$0xff]
  %v1031 = vld [vmem:[%s2 + $0x98] sm:$0xff]
  %v1032 = vld [vmem:[%s2 + $0xa0] sm:$0xff]
  %v1033 = vld [vmem:[%s2 + $0xa8] sm:$0xff]
  %v1034 = vld [vmem:[%s2 + $0xb0] sm:$0xff]
  %v1035 = vld [vmem:[%s2 + $0xb8] sm:$0xff]
  %v1037 = vsel %vm314, %v1011, 0
  %1039 = vmatprep.subr.mxu0 %v1013
  %1040 = vmatpush1.msra.mxu0 %v1012
  %1041 = vmatprep.subr.mxu0 %v1015
  %1042 = vmatpush1.msra.mxu0 %v1014
  %1043 = vmatprep.subr.mxu0 %v1017
  %1044 = vmatpush1.msra.mxu0 %v1016
  %1045 = vmatprep.subr.mxu0 %v1019
  %1046 = vmatpush1.msra.mxu0 %v1018
  %1047 = vmatprep.subr.mxu0 %v1021
  %1048 = vmatpush1.msra.mxu0 %v1020
  %1049 = vmatprep.subr.mxu0 %v1023
  %1050 = vmatpush1.msra.mxu0 %v1022
  %1051 = vmatprep.subr.mxu0 %v1025
  %1052 = vmatpush1.msra.mxu0 %v1024
  %1053 = vmatprep.subr.mxu0 %v1027
  %1054 = vmatpush1.msra.mxu0 %v1026
  %1055 = vmatprep.subr.mxu0 %v1029
  %1056 = vmatpush1.msra.mxu0 %v1028
  %1057 = vmatprep.subr.mxu0 %v1031
  %1058 = vmatpush1.msra.mxu0 %v1030
  %1059 = vmatprep.subr.mxu0 %v1033
  %1060 = vmatpush1.msra.mxu0 %v1032
  %1061 = vmatprep.subr.mxu0 %v1035
  %1062 = vmatpush1.msra.mxu0 %v1034
  %1063 = vmatprep.subr.mxu0 0.0
  %1064 = vmatpush1.msra.mxu0 0.0
  %1065 = vmatprep.subr.mxu0 0.0
  %1066 = vmatpush1.msra.mxu0 0.0
  %1067 = vmatprep.subr.mxu0 0.0
  %1068 = vmatpush1.msra.mxu0 0.0
  %1069 = vmatprep.subr.mxu0 0.0
  %1070 = vmatpush1.msra.mxu0 0.0
  %1071 = vmatprep.subr.mxu0 0.0
  %1072 = vmatpush1.msra.mxu0 0.0
  %1073 = vmatprep.subr.mxu0 0.0
  %1074 = vmatpush1.msra.mxu0 0.0
  %1075 = vmatprep.subr.mxu0 0.0
  %1076 = vmatpush1.msra.mxu0 0.0
  %1077 = vmatprep.subr.mxu0 0.0
  %1078 = vmatpush1.msra.mxu0 0.0
  %1079 = vmatprep.subr.mxu0 0.0
  %1080 = vmatpush1.msra.mxu0 0.0
  %1081 = vmatprep.subr.mxu0 0.0
  %1082 = vmatpush1.msra.mxu0 0.0
  %1083 = vmatprep.subr.mxu0 0.0
  %1084 = vmatpush1.msra.mxu0 0.0
  %1085 = vmatprep.subr.mxu0 0.0
  %1086 = vmatpush1.msra.mxu0 0.0
  %1087 = vmatprep.subr.mxu0 0.0
  %1088 = vmatpush1.msra.mxu0 0.0
  %1089 = vmatprep.subr.mxu0 0.0
  %1090 = vmatpush1.msra.mxu0 0.0
  %1091 = vmatprep.subr.mxu0 0.0
  %1092 = vmatpush1.msra.mxu0 0.0
  %1093 = vmatprep.subr.mxu0 0.0
  %1094 = vmatpush1.msra.mxu0 0.0
  %1095 = vmatprep.subr.mxu0 0.0
  %1096 = vmatpush1.msra.mxu0 0.0
  %1097 = vmatprep.subr.mxu0 0.0
  %1098 = vmatpush1.msra.mxu0 0.0
  %1099 = vmatprep.subr.mxu0 0.0
  %1100 = vmatpush1.msra.mxu0 0.0
  %1101 = vmatprep.subr.mxu0 0.0
  %1102 = vmatpush1.msra.mxu0 0.0
  %1103 = vmatprep.mubr.f32.mxu0 0.0
  %1104 = vmatmul.mubr.f32.gmra.mrb[0].mxu0 %v1037
  %v1105 = vpop.f32.mrb[0].mxu0
  %v1106 = vadd.f32 %v175, %v1105
  %v1107 = vpop.f32.mrb[0].mxu0
  %v1108 = vadd.f32 %v179, %v1107
  %1109 = vdwg.mxu0
  %v1110 = vxor.u32 %v1106, 2147483648
  %v1111 = vxor.u32 %v1108, 2147483648
  %v1112 = vmul.f32 %v1110, 1.442695
  %v1113 = vpow.pop %v1112
  %v1114 = vmul.f32 %v1111, 1.442695
  %v1115 = vpow.pop %v1114
  %v1116 = vadd.f32 %v1113, 1.0
  %v1117 = vadd.f32 %v1115, 1.0
  %v1118 = vrcp.pop %v1116
  %v1119 = vmul.f32 1.0, %v1118
  %v1120 = vrcp.pop %v1117
  %v1121 = vmul.f32 1.0, %v1120
  %v1122 = vtanh.pop %v1108
  %v1123 = vmul.f32 %v1119, %v893
  %1125 = vrot.lane.b32.xlu0 %v1122, 64
  %v1126 = vpop.permute.xlu0 %1125
  %v1128 = vmul.f32 %v1119, %v1126
  %1130 = vrot.lane.b32.xlu0 %v1128, 64
  %v1131 = vpop.permute.xlu0 %1130
  %v1133 = vadd.f32 %v1123, %v1131
  %v1134 = vtanh.pop %v1133
  %1136 = vrot.lane.b32.xlu0 %v1134, 64
  %v1137 = vpop.permute.xlu0 %1136
  %v1139 = vmul.f32 %v1121, %v1137
  %1140 = vst.msk [vmem:[#allocation3 + $0x18] sm:$0xff] %vm419, %v1139
  %v1141 = vld [vmem:[#allocation2 + $0x20] sm:$0xff]
  %v1142 = vld [vmem:[%s1 + $0x20] sm:$0xff]
  %v1143 = vld [vmem:[%s1 + $0x28] sm:$0xff]
  %v1144 = vld [vmem:[%s1 + $0x30] sm:$0xff]
  %v1145 = vld [vmem:[%s1 + $0x38] sm:$0xff]
  %v1146 = vsel %vm31, %v1005, 0
  %1148 = vmatprep.subr.mxu0 0.0
  %1149 = vmatpush1.msra.mxu0 %v1142
  %1150 = vmatprep.subr.mxu0 0.0
  %1151 = vmatpush1.msra.mxu0 %v1143
  %1152 = vmatprep.subr.mxu0 0.0
  %1153 = vmatpush1.msra.mxu0 %v1144
  %1154 = vmatprep.subr.mxu0 0.0
  %1155 = vmatpush1.msra.mxu0 %v1145
  %1156 = vmatprep.subr.mxu0 0.0
  %1157 = vmatpush1.msra.mxu0 0.0
  %1158 = vmatprep.subr.mxu0 0.0
  %1159 = vmatpush1.msra.mxu0 0.0
  %1160 = vmatprep.subr.mxu0 0.0
  %1161 = vmatpush1.msra.mxu0 0.0
  %1162 = vmatprep.subr.mxu0 0.0
  %1163 = vmatpush1.msra.mxu0 0.0
  %1164 = vmatprep.subr.mxu0 0.0
  %1165 = vmatpush1.msra.mxu0 0.0
  %1166 = vmatprep.subr.mxu0 0.0
  %1167 = vmatpush1.msra.mxu0 0.0
  %1168 = vmatprep.subr.mxu0 0.0
  %1169 = vmatpush1.msra.mxu0 0.0
  %1170 = vmatprep.subr.mxu0 0.0
  %1171 = vmatpush1.msra.mxu0 0.0
  %1172 = vmatprep.subr.mxu0 0.0
  %1173 = vmatpush1.msra.mxu0 0.0
  %1174 = vmatprep.subr.mxu0 0.0
  %1175 = vmatpush1.msra.mxu0 0.0
  %1176 = vmatprep.subr.mxu0 0.0
  %1177 = vmatpush1.msra.mxu0 0.0
  %1178 = vmatprep.subr.mxu0 0.0
  %1179 = vmatpush1.msra.mxu0 0.0
  %1180 = vmatprep.subr.mxu0 0.0
  %1181 = vmatpush1.msra.mxu0 0.0
  %1182 = vmatprep.subr.mxu0 0.0
  %1183 = vmatpush1.msra.mxu0 0.0
  %1184 = vmatprep.subr.mxu0 0.0
  %1185 = vmatpush1.msra.mxu0 0.0
  %1186 = vmatprep.subr.mxu0 0.0
  %1187 = vmatpush1.msra.mxu0 0.0
  %1188 = vmatprep.subr.mxu0 0.0
  %1189 = vmatpush1.msra.mxu0 0.0
  %1190 = vmatprep.subr.mxu0 0.0
  %1191 = vmatpush1.msra.mxu0 0.0
  %1192 = vmatprep.subr.mxu0 0.0
  %1193 = vmatpush1.msra.mxu0 0.0
  %1194 = vmatprep.subr.mxu0 0.0
  %1195 = vmatpush1.msra.mxu0 0.0
  %1196 = vmatprep.subr.mxu0 0.0
  %1197 = vmatpush1.msra.mxu0 0.0
  %1198 = vmatprep.subr.mxu0 0.0
  %1199 = vmatpush1.msra.mxu0 0.0
  %1200 = vmatprep.subr.mxu0 0.0
  %1201 = vmatpush1.msra.mxu0 0.0
  %1202 = vmatprep.subr.mxu0 0.0
  %1203 = vmatpush1.msra.mxu0 0.0
  %1204 = vmatprep.subr.mxu0 0.0
  %1205 = vmatpush1.msra.mxu0 0.0
  %1206 = vmatprep.subr.mxu0 0.0
  %1207 = vmatpush1.msra.mxu0 0.0
  %1208 = vmatprep.subr.mxu0 0.0
  %1209 = vmatpush1.msra.mxu0 0.0
  %1210 = vmatprep.subr.mxu0 0.0
  %1211 = vmatpush1.msra.mxu0 0.0
  %1212 = vmatprep.mubr.f32.mxu0 0.0
  %1213 = vmatmul.mubr.f32.gmra.mrb[0].mxu0 %v1146
  %v1214 = vpop.f32.mrb[0].mxu0
  %v1215 = vadd.f32 0.0, %v1214
  %v1216 = vpop.f32.mrb[0].mxu0
  %1217 = vdwg.mxu0
  %v1218 = vadd.f32 %v1141, %v1215
  %v1219 = vxor.u32 %v1218, 2147483648
  %v1220 = vmul.f32 %v1219, 1.442695
  %v1221 = vpow.pop %v1220
  %v1222 = vadd.f32 %v1221, 1.0
  %v1223 = vrcp.pop %v1222
  %v1224 = vmul.f32 1.0, %v1223
  %v1225 = vtanh.pop %v1218
  %v1226 = vmul.f32 %v1224, %v996
  %1228 = vrot.lane.b32.xlu0 %v1225, 32
  %v1229 = vpop.permute.xlu0 %1228
  %v1231 = vmul.f32 %v1224, %v1229
  %1233 = vrot.lane.b32.xlu0 %v1231, 32
  %v1234 = vpop.permute.xlu0 %1233
  %v1236 = vadd.f32 %v1226, %v1234
  %v1237 = vtanh.pop %v1236
  %1239 = vrot.lane.b32.xlu0 %v1237, 32
  %v1240 = vpop.permute.xlu0 %1239
  %v1242 = vmul.f32 %v1224, %v1240
  %1244 = vrot.lane.b32.xlu0 %v1242, 64
  %v1245 = vpop.permute.xlu0 %1244
  %1248 = vrot.lane.b32.xlu0 %v1139, 32
  %v1249 = vpop.permute.xlu0 %1248
  %v1251 = vsel %vm31, %v1245, %v1249
  %v1252 = vld [vmem:[%s2] sm:$0xff]
  %v1253 = vld [vmem:[%s2 + $0x8] sm:$0xff]
  %v1254 = vld [vmem:[%s2 + $0x10] sm:$0xff]
  %v1255 = vld [vmem:[%s2 + $0x18] sm:$0xff]
  %v1256 = vld [vmem:[%s2 + $0x20] sm:$0xff]
  %v1257 = vld [vmem:[%s2 + $0x28] sm:$0xff]
  %v1258 = vld [vmem:[%s2 + $0x30] sm:$0xff]
  %v1259 = vld [vmem:[%s2 + $0x38] sm:$0xff]
  %v1260 = vld [vmem:[%s2 + $0x40] sm:$0xff]
  %v1261 = vld [vmem:[%s2 + $0x48] sm:$0xff]
  %v1262 = vld [vmem:[%s2 + $0x50] sm:$0xff]
  %v1263 = vld [vmem:[%s2 + $0x58] sm:$0xff]
  %v1264 = vld [vmem:[%s2 + $0x60] sm:$0xff]
  %v1265 = vld [vmem:[%s2 + $0x68] sm:$0xff]
  %v1266 = vld [vmem:[%s2 + $0x70] sm:$0xff]
  %v1267 = vld [vmem:[%s2 + $0x78] sm:$0xff]
  %v1268 = vld [vmem:[%s2 + $0x80] sm:$0xff]
  %v1269 = vld [vmem:[%s2 + $0x88] sm:$0xff]
  %v1270 = vld [vmem:[%s2 + $0x90] sm:$0xff]
  %v1271 = vld [vmem:[%s2 + $0x98] sm:$0xff]
  %v1272 = vld [vmem:[%s2 + $0xa0] sm:$0xff]
  %v1273 = vld [vmem:[%s2 + $0xa8] sm:$0xff]
  %v1274 = vld [vmem:[%s2 + $0xb0] sm:$0xff]
  %v1275 = vld [vmem:[%s2 + $0xb8] sm:$0xff]
  %v1277 = vsel %vm314, %v1251, 0
  %1279 = vmatprep.subr.mxu0 %v1253
  %1280 = vmatpush1.msra.mxu0 %v1252
  %1281 = vmatprep.subr.mxu0 %v1255
  %1282 = vmatpush1.msra.mxu0 %v1254
  %1283 = vmatprep.subr.mxu0 %v1257
  %1284 = vmatpush1.msra.mxu0 %v1256
  %1285 = vmatprep.subr.mxu0 %v1259
  %1286 = vmatpush1.msra.mxu0 %v1258
  %1287 = vmatprep.subr.mxu0 %v1261
  %1288 = vmatpush1.msra.mxu0 %v1260
  %1289 = vmatprep.subr.mxu0 %v1263
  %1290 = vmatpush1.msra.mxu0 %v1262
  %1291 = vmatprep.subr.mxu0 %v1265
  %1292 = vmatpush1.msra.mxu0 %v1264
  %1293 = vmatprep.subr.mxu0 %v1267
  %1294 = vmatpush1.msra.mxu0 %v1266
  %1295 = vmatprep.subr.mxu0 %v1269
  %1296 = vmatpush1.msra.mxu0 %v1268
  %1297 = vmatprep.subr.mxu0 %v1271
  %1298 = vmatpush1.msra.mxu0 %v1270
  %1299 = vmatprep.subr.mxu0 %v1273
  %1300 = vmatpush1.msra.mxu0 %v1272
  %1301 = vmatprep.subr.mxu0 %v1275
  %1302 = vmatpush1.msra.mxu0 %v1274
  %1303 = vmatprep.subr.mxu0 0.0
  %1304 = vmatpush1.msra.mxu0 0.0
  %1305 = vmatprep.subr.mxu0 0.0
  %1306 = vmatpush1.msra.mxu0 0.0
  %1307 = vmatprep.subr.mxu0 0.0
  %1308 = vmatpush1.msra.mxu0 0.0
  %1309 = vmatprep.subr.mxu0 0.0
  %1310 = vmatpush1.msra.mxu0 0.0
  %1311 = vmatprep.subr.mxu0 0.0
  %1312 = vmatpush1.msra.mxu0 0.0
  %1313 = vmatprep.subr.mxu0 0.0
  %1314 = vmatpush1.msra.mxu0 0.0
  %1315 = vmatprep.subr.mxu0 0.0
  %1316 = vmatpush1.msra.mxu0 0.0
  %1317 = vmatprep.subr.mxu0 0.0
  %1318 = vmatpush1.msra.mxu0 0.0
  %1319 = vmatprep.subr.mxu0 0.0
  %1320 = vmatpush1.msra.mxu0 0.0
  %1321 = vmatprep.subr.mxu0 0.0
  %1322 = vmatpush1.msra.mxu0 0.0
  %1323 = vmatprep.subr.mxu0 0.0
  %1324 = vmatpush1.msra.mxu0 0.0
  %1325 = vmatprep.subr.mxu0 0.0
  %1326 = vmatpush1.msra.mxu0 0.0
  %1327 = vmatprep.subr.mxu0 0.0
  %1328 = vmatpush1.msra.mxu0 0.0
  %1329 = vmatprep.subr.mxu0 0.0
  %1330 = vmatpush1.msra.mxu0 0.0
  %1331 = vmatprep.subr.mxu0 0.0
  %1332 = vmatpush1.msra.mxu0 0.0
  %1333 = vmatprep.subr.mxu0 0.0
  %1334 = vmatpush1.msra.mxu0 0.0
  %1335 = vmatprep.subr.mxu0 0.0
  %1336 = vmatpush1.msra.mxu0 0.0
  %1337 = vmatprep.subr.mxu0 0.0
  %1338 = vmatpush1.msra.mxu0 0.0
  %1339 = vmatprep.subr.mxu0 0.0
  %1340 = vmatpush1.msra.mxu0 0.0
  %1341 = vmatprep.subr.mxu0 0.0
  %1342 = vmatpush1.msra.mxu0 0.0
  %1343 = vmatprep.mubr.f32.mxu0 0.0
  %1344 = vmatmul.mubr.f32.gmra.mrb[0].mxu0 %v1277
  %v1345 = vpop.f32.mrb[0].mxu0
  %v1346 = vadd.f32 %v175, %v1345
  %v1347 = vpop.f32.mrb[0].mxu0
  %v1348 = vadd.f32 %v179, %v1347
  %1349 = vdwg.mxu0
  %v1350 = vxor.u32 %v1346, 2147483648
  %v1351 = vxor.u32 %v1348, 2147483648
  %v1352 = vmul.f32 %v1350, 1.442695
  %v1353 = vpow.pop %v1352
  %v1354 = vmul.f32 %v1351, 1.442695
  %v1355 = vpow.pop %v1354
  %v1356 = vadd.f32 %v1353, 1.0
  %v1357 = vadd.f32 %v1355, 1.0
  %v1358 = vrcp.pop %v1356
  %v1359 = vmul.f32 1.0, %v1358
  %v1360 = vrcp.pop %v1357
  %v1361 = vmul.f32 1.0, %v1360
  %v1362 = vtanh.pop %v1348
  %v1363 = vmul.f32 %v1359, %v1133
  %1365 = vrot.lane.b32.xlu0 %v1362, 64
  %v1366 = vpop.permute.xlu0 %1365
  %v1368 = vmul.f32 %v1359, %v1366
  %1370 = vrot.lane.b32.xlu0 %v1368, 64
  %v1371 = vpop.permute.xlu0 %1370
  %v1373 = vadd.f32 %v1363, %v1371
  %v1374 = vtanh.pop %v1373
  %1376 = vrot.lane.b32.xlu0 %v1374, 64
  %v1377 = vpop.permute.xlu0 %1376
  %v1379 = vmul.f32 %v1361, %v1377
  %1380 = vst.msk [vmem:[#allocation3 + $0x20] sm:$0xff] %vm419, %v1379
  %v1381 = vld [vmem:[#allocation2 + $0x28] sm:$0xff]
  %v1382 = vld [vmem:[%s1 + $0x20] sm:$0xff]
  %v1383 = vld [vmem:[%s1 + $0x28] sm:$0xff]
  %v1384 = vld [vmem:[%s1 + $0x30] sm:$0xff]
  %v1385 = vld [vmem:[%s1 + $0x38] sm:$0xff]
  %v1386 = vsel %vm31, %v1245, 0
  %1388 = vmatprep.subr.mxu0 0.0
  %1389 = vmatpush1.msra.mxu0 %v1382
  %1390 = vmatprep.subr.mxu0 0.0
  %1391 = vmatpush1.msra.mxu0 %v1383
  %1392 = vmatprep.subr.mxu0 0.0
  %1393 = vmatpush1.msra.mxu0 %v1384
  %1394 = vmatprep.subr.mxu0 0.0
  %1395 = vmatpush1.msra.mxu0 %v1385
  %1396 = vmatprep.subr.mxu0 0.0
  %1397 = vmatpush1.msra.mxu0 0.0
  %1398 = vmatprep.subr.mxu0 0.0
  %1399 = vmatpush1.msra.mxu0 0.0
  %1400 = vmatprep.subr.mxu0 0.0
  %1401 = vmatpush1.msra.mxu0 0.0
  %1402 = vmatprep.subr.mxu0 0.0
  %1403 = vmatpush1.msra.mxu0 0.0
  %1404 = vmatprep.subr.mxu0 0.0
  %1405 = vmatpush1.msra.mxu0 0.0
  %1406 = vmatprep.subr.mxu0 0.0
  %1407 = vmatpush1.msra.mxu0 0.0
  %1408 = vmatprep.subr.mxu0 0.0
  %1409 = vmatpush1.msra.mxu0 0.0
  %1410 = vmatprep.subr.mxu0 0.0
  %1411 = vmatpush1.msra.mxu0 0.0
  %1412 = vmatprep.subr.mxu0 0.0
  %1413 = vmatpush1.msra.mxu0 0.0
  %1414 = vmatprep.subr.mxu0 0.0
  %1415 = vmatpush1.msra.mxu0 0.0
  %1416 = vmatprep.subr.mxu0 0.0
  %1417 = vmatpush1.msra.mxu0 0.0
  %1418 = vmatprep.subr.mxu0 0.0
  %1419 = vmatpush1.msra.mxu0 0.0
  %1420 = vmatprep.subr.mxu0 0.0
  %1421 = vmatpush1.msra.mxu0 0.0
  %1422 = vmatprep.subr.mxu0 0.0
  %1423 = vmatpush1.msra.mxu0 0.0
  %1424 = vmatprep.subr.mxu0 0.0
  %1425 = vmatpush1.msra.mxu0 0.0
  %1426 = vmatprep.subr.mxu0 0.0
  %1427 = vmatpush1.msra.mxu0 0.0
  %1428 = vmatprep.subr.mxu0 0.0
  %1429 = vmatpush1.msra.mxu0 0.0
  %1430 = vmatprep.subr.mxu0 0.0
  %1431 = vmatpush1.msra.mxu0 0.0
  %1432 = vmatprep.subr.mxu0 0.0
  %1433 = vmatpush1.msra.mxu0 0.0
  %1434 = vmatprep.subr.mxu0 0.0
  %1435 = vmatpush1.msra.mxu0 0.0
  %1436 = vmatprep.subr.mxu0 0.0
  %1437 = vmatpush1.msra.mxu0 0.0
  %1438 = vmatprep.subr.mxu0 0.0
  %1439 = vmatpush1.msra.mxu0 0.0
  %1440 = vmatprep.subr.mxu0 0.0
  %1441 = vmatpush1.msra.mxu0 0.0
  %1442 = vmatprep.subr.mxu0 0.0
  %1443 = vmatpush1.msra.mxu0 0.0
  %1444 = vmatprep.subr.mxu0 0.0
  %1445 = vmatpush1.msra.mxu0 0.0
  %1446 = vmatprep.subr.mxu0 0.0
  %1447 = vmatpush1.msra.mxu0 0.0
  %1448 = vmatprep.subr.mxu0 0.0
  %1449 = vmatpush1.msra.mxu0 0.0
  %1450 = vmatprep.subr.mxu0 0.0
  %1451 = vmatpush1.msra.mxu0 0.0
  %1452 = vmatprep.mubr.f32.mxu0 0.0
  %1453 = vmatmul.mubr.f32.gmra.mrb[0].mxu0 %v1386
  %v1454 = vpop.f32.mrb[0].mxu0
  %v1455 = vadd.f32 0.0, %v1454
  %v1456 = vpop.f32.mrb[0].mxu0
  %1457 = vdwg.mxu0
  %v1458 = vadd.f32 %v1381, %v1455
  %v1459 = vxor.u32 %v1458, 2147483648
  %v1460 = vmul.f32 %v1459, 1.442695
  %v1461 = vpow.pop %v1460
  %v1462 = vadd.f32 %v1461, 1.0
  %v1463 = vrcp.pop %v1462
  %v1464 = vmul.f32 1.0, %v1463
  %v1465 = vtanh.pop %v1458
  %v1466 = vmul.f32 %v1464, %v1236
  %1468 = vrot.lane.b32.xlu0 %v1465, 32
  %v1469 = vpop.permute.xlu0 %1468
  %v1471 = vmul.f32 %v1464, %v1469
  %1473 = vrot.lane.b32.xlu0 %v1471, 32
  %v1474 = vpop.permute.xlu0 %1473
  %v1476 = vadd.f32 %v1466, %v1474
  %v1477 = vtanh.pop %v1476
  %1479 = vrot.lane.b32.xlu0 %v1477, 32
  %v1480 = vpop.permute.xlu0 %1479
  %v1482 = vmul.f32 %v1464, %v1480
  %1484 = vrot.lane.b32.xlu0 %v1482, 64
  %v1485 = vpop.permute.xlu0 %1484
  %1488 = vrot.lane.b32.xlu0 %v1379, 32
  %v1489 = vpop.permute.xlu0 %1488
  %v1491 = vsel %vm31, %v1485, %v1489
  %v1492 = vld [vmem:[%s2] sm:$0xff]
  %v1493 = vld [vmem:[%s2 + $0x8] sm:$0xff]
  %v1494 = vld [vmem:[%s2 + $0x10] sm:$0xff]
  %v1495 = vld [vmem:[%s2 + $0x18] sm:$0xff]
  %v1496 = vld [vmem:[%s2 + $0x20] sm:$0xff]
  %v1497 = vld [vmem:[%s2 + $0x28] sm:$0xff]
  %v1498 = vld [vmem:[%s2 + $0x30] sm:$0xff]
  %v1499 = vld [vmem:[%s2 + $0x38] sm:$0xff]
  %v1500 = vld [vmem:[%s2 + $0x40] sm:$0xff]
  %v1501 = vld [vmem:[%s2 + $0x48] sm:$0xff]
  %v1502 = vld [vmem:[%s2 + $0x50] sm:$0xff]
  %v1503 = vld [vmem:[%s2 + $0x58] sm:$0xff]
  %v1504 = vld [vmem:[%s2 + $0x60] sm:$0xff]
  %v1505 = vld [vmem:[%s2 + $0x68] sm:$0xff]
  %v1506 = vld [vmem:[%s2 + $0x70] sm:$0xff]
  %v1507 = vld [vmem:[%s2 + $0x78] sm:$0xff]
  %v1508 = vld [vmem:[%s2 + $0x80] sm:$0xff]
  %v1509 = vld [vmem:[%s2 + $0x88] sm:$0xff]
  %v1510 = vld [vmem:[%s2 + $0x90] sm:$0xff]
  %v1511 = vld [vmem:[%s2 + $0x98] sm:$0xff]
  %v1512 = vld [vmem:[%s2 + $0xa0] sm:$0xff]
  %v1513 = vld [vmem:[%s2 + $0xa8] sm:$0xff]
  %v1514 = vld [vmem:[%s2 + $0xb0] sm:$0xff]
  %v1515 = vld [vmem:[%s2 + $0xb8] sm:$0xff]
  %v1517 = vsel %vm314, %v1491, 0
  %1519 = vmatprep.subr.mxu0 %v1493
  %1520 = vmatpush1.msra.mxu0 %v1492
  %1521 = vmatprep.subr.mxu0 %v1495
  %1522 = vmatpush1.msra.mxu0 %v1494
  %1523 = vmatprep.subr.mxu0 %v1497
  %1524 = vmatpush1.msra.mxu0 %v1496
  %1525 = vmatprep.subr.mxu0 %v1499
  %1526 = vmatpush1.msra.mxu0 %v1498
  %1527 = vmatprep.subr.mxu0 %v1501
  %1528 = vmatpush1.msra.mxu0 %v1500
  %1529 = vmatprep.subr.mxu0 %v1503
  %1530 = vmatpush1.msra.mxu0 %v1502
  %1531 = vmatprep.subr.mxu0 %v1505
  %1532 = vmatpush1.msra.mxu0 %v1504
  %1533 = vmatprep.subr.mxu0 %v1507
  %1534 = vmatpush1.msra.mxu0 %v1506
  %1535 = vmatprep.subr.mxu0 %v1509
  %1536 = vmatpush1.msra.mxu0 %v1508
  %1537 = vmatprep.subr.mxu0 %v1511
  %1538 = vmatpush1.msra.mxu0 %v1510
  %1539 = vmatprep.subr.mxu0 %v1513
  %1540 = vmatpush1.msra.mxu0 %v1512
  %1541 = vmatprep.subr.mxu0 %v1515
  %1542 = vmatpush1.msra.mxu0 %v1514
  %1543 = vmatprep.subr.mxu0 0.0
  %1544 = vmatpush1.msra.mxu0 0.0
  %1545 = vmatprep.subr.mxu0 0.0
  %1546 = vmatpush1.msra.mxu0 0.0
  %1547 = vmatprep.subr.mxu0 0.0
  %1548 = vmatpush1.msra.mxu0 0.0
  %1549 = vmatprep.subr.mxu0 0.0
  %1550 = vmatpush1.msra.mxu0 0.0
  %1551 = vmatprep.subr.mxu0 0.0
  %1552 = vmatpush1.msra.mxu0 0.0
  %1553 = vmatprep.subr.mxu0 0.0
  %1554 = vmatpush1.msra.mxu0 0.0
  %1555 = vmatprep.subr.mxu0 0.0
  %1556 = vmatpush1.msra.mxu0 0.0
  %1557 = vmatprep.subr.mxu0 0.0
  %1558 = vmatpush1.msra.mxu0 0.0
  %1559 = vmatprep.subr.mxu0 0.0
  %1560 = vmatpush1.msra.mxu0 0.0
  %1561 = vmatprep.subr.mxu0 0.0
  %1562 = vmatpush1.msra.mxu0 0.0
  %1563 = vmatprep.subr.mxu0 0.0
  %1564 = vmatpush1.msra.mxu0 0.0
  %1565 = vmatprep.subr.mxu0 0.0
  %1566 = vmatpush1.msra.mxu0 0.0
  %1567 = vmatprep.subr.mxu0 0.0
  %1568 = vmatpush1.msra.mxu0 0.0
  %1569 = vmatprep.subr.mxu0 0.0
  %1570 = vmatpush1.msra.mxu0 0.0
  %1571 = vmatprep.subr.mxu0 0.0
  %1572 = vmatpush1.msra.mxu0 0.0
  %1573 = vmatprep.subr.mxu0 0.0
  %1574 = vmatpush1.msra.mxu0 0.0
  %1575 = vmatprep.subr.mxu0 0.0
  %1576 = vmatpush1.msra.mxu0 0.0
  %1577 = vmatprep.subr.mxu0 0.0
  %1578 = vmatpush1.msra.mxu0 0.0
  %1579 = vmatprep.subr.mxu0 0.0
  %1580 = vmatpush1.msra.mxu0 0.0
  %1581 = vmatprep.subr.mxu0 0.0
  %1582 = vmatpush1.msra.mxu0 0.0
  %1583 = vmatprep.mubr.f32.mxu0 0.0
  %1584 = vmatmul.mubr.f32.gmra.mrb[0].mxu0 %v1517
  %v1585 = vpop.f32.mrb[0].mxu0
  %v1586 = vadd.f32 %v175, %v1585
  %v1587 = vpop.f32.mrb[0].mxu0
  %v1588 = vadd.f32 %v179, %v1587
  %1589 = vdwg.mxu0
  %v1590 = vxor.u32 %v1586, 2147483648
  %v1591 = vxor.u32 %v1588, 2147483648
  %v1592 = vmul.f32 %v1590, 1.442695
  %v1593 = vpow.pop %v1592
  %v1594 = vmul.f32 %v1591, 1.442695
  %v1595 = vpow.pop %v1594
  %v1596 = vadd.f32 %v1593, 1.0
  %v1597 = vadd.f32 %v1595, 1.0
  %v1598 = vrcp.pop %v1596
  %v1599 = vmul.f32 1.0, %v1598
  %v1600 = vrcp.pop %v1597
  %v1601 = vmul.f32 1.0, %v1600
  %v1602 = vtanh.pop %v1588
  %v1603 = vmul.f32 %v1599, %v1373
  %1605 = vrot.lane.b32.xlu0 %v1602, 64
  %v1606 = vpop.permute.xlu0 %1605
  %v1608 = vmul.f32 %v1599, %v1606
  %1610 = vrot.lane.b32.xlu0 %v1608, 64
  %v1611 = vpop.permute.xlu0 %1610
  %v1613 = vadd.f32 %v1603, %v1611
  %v1614 = vtanh.pop %v1613
  %1616 = vrot.lane.b32.xlu0 %v1614, 64
  %v1617 = vpop.permute.xlu0 %1616
  %v1619 = vmul.f32 %v1601, %v1617
  %1620 = vst.msk [vmem:[#allocation3 + $0x28] sm:$0xff] %vm419, %v1619
  %v1621 = vld [vmem:[#allocation2 + $0x30] sm:$0xff]
  %v1622 = vld [vmem:[%s1 + $0x20] sm:$0xff]
  %v1623 = vld [vmem:[%s1 + $0x28] sm:$0xff]
  %v1624 = vld [vmem:[%s1 + $0x30] sm:$0xff]
  %v1625 = vld [vmem:[%s1 + $0x38] sm:$0xff]
  %v1626 = vsel %vm31, %v1485, 0
  %1628 = vmatprep.subr.mxu0 0.0
  %1629 = vmatpush1.msra.mxu0 %v1622
  %1630 = vmatprep.subr.mxu0 0.0
  %1631 = vmatpush1.msra.mxu0 %v1623
  %1632 = vmatprep.subr.mxu0 0.0
  %1633 = vmatpush1.msra.mxu0 %v1624
  %1634 = vmatprep.subr.mxu0 0.0
  %1635 = vmatpush1.msra.mxu0 %v1625
  %1636 = vmatprep.subr.mxu0 0.0
  %1637 = vmatpush1.msra.mxu0 0.0
  %1638 = vmatprep.subr.mxu0 0.0
  %1639 = vmatpush1.msra.mxu0 0.0
  %1640 = vmatprep.subr.mxu0 0.0
  %1641 = vmatpush1.msra.mxu0 0.0
  %1642 = vmatprep.subr.mxu0 0.0
  %1643 = vmatpush1.msra.mxu0 0.0
  %1644 = vmatprep.subr.mxu0 0.0
  %1645 = vmatpush1.msra.mxu0 0.0
  %1646 = vmatprep.subr.mxu0 0.0
  %1647 = vmatpush1.msra.mxu0 0.0
  %1648 = vmatprep.subr.mxu0 0.0
  %1649 = vmatpush1.msra.mxu0 0.0
  %1650 = vmatprep.subr.mxu0 0.0
  %1651 = vmatpush1.msra.mxu0 0.0
  %1652 = vmatprep.subr.mxu0 0.0
  %1653 = vmatpush1.msra.mxu0 0.0
  %1654 = vmatprep.subr.mxu0 0.0
  %1655 = vmatpush1.msra.mxu0 0.0
  %1656 = vmatprep.subr.mxu0 0.0
  %1657 = vmatpush1.msra.mxu0 0.0
  %1658 = vmatprep.subr.mxu0 0.0
  %1659 = vmatpush1.msra.mxu0 0.0
  %1660 = vmatprep.subr.mxu0 0.0
  %1661 = vmatpush1.msra.mxu0 0.0
  %1662 = vmatprep.subr.mxu0 0.0
  %1663 = vmatpush1.msra.mxu0 0.0
  %1664 = vmatprep.subr.mxu0 0.0
  %1665 = vmatpush1.msra.mxu0 0.0
  %1666 = vmatprep.subr.mxu0 0.0
  %1667 = vmatpush1.msra.mxu0 0.0
  %1668 = vmatprep.subr.mxu0 0.0
  %1669 = vmatpush1.msra.mxu0 0.0
  %1670 = vmatprep.subr.mxu0 0.0
  %1671 = vmatpush1.msra.mxu0 0.0
  %1672 = vmatprep.subr.mxu0 0.0
  %1673 = vmatpush1.msra.mxu0 0.0
  %1674 = vmatprep.subr.mxu0 0.0
  %1675 = vmatpush1.msra.mxu0 0.0
  %1676 = vmatprep.subr.mxu0 0.0
  %1677 = vmatpush1.msra.mxu0 0.0
  %1678 = vmatprep.subr.mxu0 0.0
  %1679 = vmatpush1.msra.mxu0 0.0
  %1680 = vmatprep.subr.mxu0 0.0
  %1681 = vmatpush1.msra.mxu0 0.0
  %1682 = vmatprep.subr.mxu0 0.0
  %1683 = vmatpush1.msra.mxu0 0.0
  %1684 = vmatprep.subr.mxu0 0.0
  %1685 = vmatpush1.msra.mxu0 0.0
  %1686 = vmatprep.subr.mxu0 0.0
  %1687 = vmatpush1.msra.mxu0 0.0
  %1688 = vmatprep.subr.mxu0 0.0
  %1689 = vmatpush1.msra.mxu0 0.0
  %1690 = vmatprep.subr.mxu0 0.0
  %1691 = vmatpush1.msra.mxu0 0.0
  %1692 = vmatprep.mubr.f32.mxu0 0.0
  %1693 = vmatmul.mubr.f32.gmra.mrb[0].mxu0 %v1626
  %v1694 = vpop.f32.mrb[0].mxu0
  %v1695 = vadd.f32 0.0, %v1694
  %v1696 = vpop.f32.mrb[0].mxu0
  %1697 = vdwg.mxu0
  %v1698 = vadd.f32 %v1621, %v1695
  %v1699 = vxor.u32 %v1698, 2147483648
  %v1700 = vmul.f32 %v1699, 1.442695
  %v1701 = vpow.pop %v1700
  %v1702 = vadd.f32 %v1701, 1.0
  %v1703 = vrcp.pop %v1702
  %v1704 = vmul.f32 1.0, %v1703
  %v1705 = vtanh.pop %v1698
  %v1706 = vmul.f32 %v1704, %v1476
  %1708 = vrot.lane.b32.xlu0 %v1705, 32
  %v1709 = vpop.permute.xlu0 %1708
  %v1711 = vmul.f32 %v1704, %v1709
  %1713 = vrot.lane.b32.xlu0 %v1711, 32
  %v1714 = vpop.permute.xlu0 %1713
  %v1716 = vadd.f32 %v1706, %v1714
  %v1717 = vtanh.pop %v1716
  %1719 = vrot.lane.b32.xlu0 %v1717, 32
  %v1720 = vpop.permute.xlu0 %1719
  %v1722 = vmul.f32 %v1704, %v1720
  %1724 = vrot.lane.b32.xlu0 %v1722, 64
  %v1725 = vpop.permute.xlu0 %1724
  %1728 = vrot.lane.b32.xlu0 %v1619, 32
  %v1729 = vpop.permute.xlu0 %1728
  %v1731 = vsel %vm31, %v1725, %v1729
  %v1732 = vld [vmem:[%s2] sm:$0xff]
  %v1733 = vld [vmem:[%s2 + $0x8] sm:$0xff]
  %v1734 = vld [vmem:[%s2 + $0x10] sm:$0xff]
  %v1735 = vld [vmem:[%s2 + $0x18] sm:$0xff]
  %v1736 = vld [vmem:[%s2 + $0x20] sm:$0xff]
  %v1737 = vld [vmem:[%s2 + $0x28] sm:$0xff]
  %v1738 = vld [vmem:[%s2 + $0x30] sm:$0xff]
  %v1739 = vld [vmem:[%s2 + $0x38] sm:$0xff]
  %v1740 = vld [vmem:[%s2 + $0x40] sm:$0xff]
  %v1741 = vld [vmem:[%s2 + $0x48] sm:$0xff]
  %v1742 = vld [vmem:[%s2 + $0x50] sm:$0xff]
  %v1743 = vld [vmem:[%s2 + $0x58] sm:$0xff]
  %v1744 = vld [vmem:[%s2 + $0x60] sm:$0xff]
  %v1745 = vld [vmem:[%s2 + $0x68] sm:$0xff]
  %v1746 = vld [vmem:[%s2 + $0x70] sm:$0xff]
  %v1747 = vld [vmem:[%s2 + $0x78] sm:$0xff]
  %v1748 = vld [vmem:[%s2 + $0x80] sm:$0xff]
  %v1749 = vld [vmem:[%s2 + $0x88] sm:$0xff]
  %v1750 = vld [vmem:[%s2 + $0x90] sm:$0xff]
  %v1751 = vld [vmem:[%s2 + $0x98] sm:$0xff]
  %v1752 = vld [vmem:[%s2 + $0xa0] sm:$0xff]
  %v1753 = vld [vmem:[%s2 + $0xa8] sm:$0xff]
  %v1754 = vld [vmem:[%s2 + $0xb0] sm:$0xff]
  %v1755 = vld [vmem:[%s2 + $0xb8] sm:$0xff]
  %v1757 = vsel %vm314, %v1731, 0
  %1759 = vmatprep.subr.mxu0 %v1733
  %1760 = vmatpush1.msra.mxu0 %v1732
  %1761 = vmatprep.subr.mxu0 %v1735
  %1762 = vmatpush1.msra.mxu0 %v1734
  %1763 = vmatprep.subr.mxu0 %v1737
  %1764 = vmatpush1.msra.mxu0 %v1736
  %1765 = vmatprep.subr.mxu0 %v1739
  %1766 = vmatpush1.msra.mxu0 %v1738
  %1767 = vmatprep.subr.mxu0 %v1741
  %1768 = vmatpush1.msra.mxu0 %v1740
  %1769 = vmatprep.subr.mxu0 %v1743
  %1770 = vmatpush1.msra.mxu0 %v1742
  %1771 = vmatprep.subr.mxu0 %v1745
  %1772 = vmatpush1.msra.mxu0 %v1744
  %1773 = vmatprep.subr.mxu0 %v1747
  %1774 = vmatpush1.msra.mxu0 %v1746
  %1775 = vmatprep.subr.mxu0 %v1749
  %1776 = vmatpush1.msra.mxu0 %v1748
  %1777 = vmatprep.subr.mxu0 %v1751
  %1778 = vmatpush1.msra.mxu0 %v1750
  %1779 = vmatprep.subr.mxu0 %v1753
  %1780 = vmatpush1.msra.mxu0 %v1752
  %1781 = vmatprep.subr.mxu0 %v1755
  %1782 = vmatpush1.msra.mxu0 %v1754
  %1783 = vmatprep.subr.mxu0 0.0
  %1784 = vmatpush1.msra.mxu0 0.0
  %1785 = vmatprep.subr.mxu0 0.0
  %1786 = vmatpush1.msra.mxu0 0.0
  %1787 = vmatprep.subr.mxu0 0.0
  %1788 = vmatpush1.msra.mxu0 0.0
  %1789 = vmatprep.subr.mxu0 0.0
  %1790 = vmatpush1.msra.mxu0 0.0
  %1791 = vmatprep.subr.mxu0 0.0
  %1792 = vmatpush1.msra.mxu0 0.0
  %1793 = vmatprep.subr.mxu0 0.0
  %1794 = vmatpush1.msra.mxu0 0.0
  %1795 = vmatprep.subr.mxu0 0.0
  %1796 = vmatpush1.msra.mxu0 0.0
  %1797 = vmatprep.subr.mxu0 0.0
  %1798 = vmatpush1.msra.mxu0 0.0
  %1799 = vmatprep.subr.mxu0 0.0
  %1800 = vmatpush1.msra.mxu0 0.0
  %1801 = vmatprep.subr.mxu0 0.0
  %1802 = vmatpush1.msra.mxu0 0.0
  %1803 = vmatprep.subr.mxu0 0.0
  %1804 = vmatpush1.msra.mxu0 0.0
  %1805 = vmatprep.subr.mxu0 0.0
  %1806 = vmatpush1.msra.mxu0 0.0
  %1807 = vmatprep.subr.mxu0 0.0
  %1808 = vmatpush1.msra.mxu0 0.0
  %1809 = vmatprep.subr.mxu0 0.0
  %1810 = vmatpush1.msra.mxu0 0.0
  %1811 = vmatprep.subr.mxu0 0.0
  %1812 = vmatpush1.msra.mxu0 0.0
  %1813 = vmatprep.subr.mxu0 0.0
  %1814 = vmatpush1.msra.mxu0 0.0
  %1815 = vmatprep.subr.mxu0 0.0
  %1816 = vmatpush1.msra.mxu0 0.0
  %1817 = vmatprep.subr.mxu0 0.0
  %1818 = vmatpush1.msra.mxu0 0.0
  %1819 = vmatprep.subr.mxu0 0.0
  %1820 = vmatpush1.msra.mxu0 0.0
  %1821 = vmatprep.subr.mxu0 0.0
  %1822 = vmatpush1.msra.mxu0 0.0
  %1823 = vmatprep.mubr.f32.mxu0 0.0
  %1824 = vmatmul.mubr.f32.gmra.mrb[0].mxu0 %v1757
  %v1825 = vpop.f32.mrb[0].mxu0
  %v1826 = vadd.f32 %v175, %v1825
  %v1827 = vpop.f32.mrb[0].mxu0
  %v1828 = vadd.f32 %v179, %v1827
  %1829 = vdwg.mxu0
  %v1830 = vxor.u32 %v1826, 2147483648
  %v1831 = vxor.u32 %v1828, 2147483648
  %v1832 = vmul.f32 %v1830, 1.442695
  %v1833 = vpow.pop %v1832
  %v1834 = vmul.f32 %v1831, 1.442695
  %v1835 = vpow.pop %v1834
  %v1836 = vadd.f32 %v1833, 1.0
  %v1837 = vadd.f32 %v1835, 1.0
  %v1838 = vrcp.pop %v1836
  %v1839 = vmul.f32 1.0, %v1838
  %v1840 = vrcp.pop %v1837
  %v1841 = vmul.f32 1.0, %v1840
  %v1842 = vtanh.pop %v1828
  %v1843 = vmul.f32 %v1839, %v1613
  %1845 = vrot.lane.b32.xlu0 %v1842, 64
  %v1846 = vpop.permute.xlu0 %1845
  %v1848 = vmul.f32 %v1839, %v1846
  %1850 = vrot.lane.b32.xlu0 %v1848, 64
  %v1851 = vpop.permute.xlu0 %1850
  %v1853 = vadd.f32 %v1843, %v1851
  %v1854 = vtanh.pop %v1853
  %1856 = vrot.lane.b32.xlu0 %v1854, 64
  %v1857 = vpop.permute.xlu0 %1856
  %v1859 = vmul.f32 %v1841, %v1857
  %1860 = vst.msk [vmem:[#allocation3 + $0x30] sm:$0xff] %vm419, %v1859
  %v1861 = vld [vmem:[#allocation2 + $0x38] sm:$0xff]
  %v1862 = vld [vmem:[%s1 + $0x20] sm:$0xff]
  %v1863 = vld [vmem:[%s1 + $0x28] sm:$0xff]
  %v1864 = vld [vmem:[%s1 + $0x30] sm:$0xff]
  %v1865 = vld [vmem:[%s1 + $0x38] sm:$0xff]
  %v1866 = vsel %vm31, %v1725, 0
  %1868 = vmatprep.subr.mxu0 0.0
  %1869 = vmatpush1.msra.mxu0 %v1862
  %1870 = vmatprep.subr.mxu0 0.0
  %1871 = vmatpush1.msra.mxu0 %v1863
  %1872 = vmatprep.subr.mxu0 0.0
  %1873 = vmatpush1.msra.mxu0 %v1864
  %1874 = vmatprep.subr.mxu0 0.0
  %1875 = vmatpush1.msra.mxu0 %v1865
  %1876 = vmatprep.subr.mxu0 0.0
  %1877 = vmatpush1.msra.mxu0 0.0
  %1878 = vmatprep.subr.mxu0 0.0
  %1879 = vmatpush1.msra.mxu0 0.0
  %1880 = vmatprep.subr.mxu0 0.0
  %1881 = vmatpush1.msra.mxu0 0.0
  %1882 = vmatprep.subr.mxu0 0.0
  %1883 = vmatpush1.msra.mxu0 0.0
  %1884 = vmatprep.subr.mxu0 0.0
  %1885 = vmatpush1.msra.mxu0 0.0
  %1886 = vmatprep.subr.mxu0 0.0
  %1887 = vmatpush1.msra.mxu0 0.0
  %1888 = vmatprep.subr.mxu0 0.0
  %1889 = vmatpush1.msra.mxu0 0.0
  %1890 = vmatprep.subr.mxu0 0.0
  %1891 = vmatpush1.msra.mxu0 0.0
  %1892 = vmatprep.subr.mxu0 0.0
  %1893 = vmatpush1.msra.mxu0 0.0
  %1894 = vmatprep.subr.mxu0 0.0
  %1895 = vmatpush1.msra.mxu0 0.0
  %1896 = vmatprep.subr.mxu0 0.0
  %1897 = vmatpush1.msra.mxu0 0.0
  %1898 = vmatprep.subr.mxu0 0.0
  %1899 = vmatpush1.msra.mxu0 0.0
  %1900 = vmatprep.subr.mxu0 0.0
  %1901 = vmatpush1.msra.mxu0 0.0
  %1902 = vmatprep.subr.mxu0 0.0
  %1903 = vmatpush1.msra.mxu0 0.0
  %1904 = vmatprep.subr.mxu0 0.0
  %1905 = vmatpush1.msra.mxu0 0.0
  %1906 = vmatprep.subr.mxu0 0.0
  %1907 = vmatpush1.msra.mxu0 0.0
  %1908 = vmatprep.subr.mxu0 0.0
  %1909 = vmatpush1.msra.mxu0 0.0
  %1910 = vmatprep.subr.mxu0 0.0
  %1911 = vmatpush1.msra.mxu0 0.0
  %1912 = vmatprep.subr.mxu0 0.0
  %1913 = vmatpush1.msra.mxu0 0.0
  %1914 = vmatprep.subr.mxu0 0.0
  %1915 = vmatpush1.msra.mxu0 0.0
  %1916 = vmatprep.subr.mxu0 0.0
  %1917 = vmatpush1.msra.mxu0 0.0
  %1918 = vmatprep.subr.mxu0 0.0
  %1919 = vmatpush1.msra.mxu0 0.0
  %1920 = vmatprep.subr.mxu0 0.0
  %1921 = vmatpush1.msra.mxu0 0.0
  %1922 = vmatprep.subr.mxu0 0.0
  %1923 = vmatpush1.msra.mxu0 0.0
  %1924 = vmatprep.subr.mxu0 0.0
  %1925 = vmatpush1.msra.mxu0 0.0
  %1926 = vmatprep.subr.mxu0 0.0
  %1927 = vmatpush1.msra.mxu0 0.0
  %1928 = vmatprep.subr.mxu0 0.0
  %1929 = vmatpush1.msra.mxu0 0.0
  %1930 = vmatprep.subr.mxu0 0.0
  %1931 = vmatpush1.msra.mxu0 0.0
  %1932 = vmatprep.mubr.f32.mxu0 0.0
  %1933 = vmatmul.mubr.f32.gmra.mrb[0].mxu0 %v1866
  %v1934 = vpop.f32.mrb[0].mxu0
  %v1935 = vadd.f32 0.0, %v1934
  %v1936 = vpop.f32.mrb[0].mxu0
  %1937 = vdwg.mxu0
  %v1938 = vadd.f32 %v1861, %v1935
  %v1939 = vxor.u32 %v1938, 2147483648
  %v1940 = vmul.f32 %v1939, 1.442695
  %v1941 = vpow.pop %v1940
  %v1942 = vadd.f32 %v1941, 1.0
  %v1943 = vrcp.pop %v1942
  %v1944 = vmul.f32 1.0, %v1943
  %v1945 = vtanh.pop %v1938
  %v1946 = vmul.f32 %v1944, %v1716
  %1948 = vrot.lane.b32.xlu0 %v1945, 32
  %v1949 = vpop.permute.xlu0 %1948
  %v1951 = vmul.f32 %v1944, %v1949
  %1953 = vrot.lane.b32.xlu0 %v1951, 32
  %v1954 = vpop.permute.xlu0 %1953
  %v1956 = vadd.f32 %v1946, %v1954
  %v1957 = vtanh.pop %v1956
  %1959 = vrot.lane.b32.xlu0 %v1957, 32
  %v1960 = vpop.permute.xlu0 %1959
  %v1962 = vmul.f32 %v1944, %v1960
  %1964 = vrot.lane.b32.xlu0 %v1962, 64
  %v1965 = vpop.permute.xlu0 %1964
  %1968 = vrot.lane.b32.xlu0 %v1859, 32
  %v1969 = vpop.permute.xlu0 %1968
  %v1971 = vsel %vm31, %v1965, %v1969
  %v1972 = vld [vmem:[%s2] sm:$0xff]
  %v1973 = vld [vmem:[%s2 + $0x8] sm:$0xff]
  %v1974 = vld [vmem:[%s2 + $0x10] sm:$0xff]
  %v1975 = vld [vmem:[%s2 + $0x18] sm:$0xff]
  %v1976 = vld [vmem:[%s2 + $0x20] sm:$0xff]
  %v1977 = vld [vmem:[%s2 + $0x28] sm:$0xff]
  %v1978 = vld [vmem:[%s2 + $0x30] sm:$0xff]
  %v1979 = vld [vmem:[%s2 + $0x38] sm:$0xff]
  %v1980 = vld [vmem:[%s2 + $0x40] sm:$0xff]
  %v1981 = vld [vmem:[%s2 + $0x48] sm:$0xff]
  %v1982 = vld [vmem:[%s2 + $0x50] sm:$0xff]
  %v1983 = vld [vmem:[%s2 + $0x58] sm:$0xff]
  %v1984 = vld [vmem:[%s2 + $0x60] sm:$0xff]
  %v1985 = vld [vmem:[%s2 + $0x68] sm:$0xff]
  %v1986 = vld [vmem:[%s2 + $0x70] sm:$0xff]
  %v1987 = vld [vmem:[%s2 + $0x78] sm:$0xff]
  %v1988 = vld [vmem:[%s2 + $0x80] sm:$0xff]
  %v1989 = vld [vmem:[%s2 + $0x88] sm:$0xff]
  %v1990 = vld [vmem:[%s2 + $0x90] sm:$0xff]
  %v1991 = vld [vmem:[%s2 + $0x98] sm:$0xff]
  %v1992 = vld [vmem:[%s2 + $0xa0] sm:$0xff]
  %v1993 = vld [vmem:[%s2 + $0xa8] sm:$0xff]
  %v1994 = vld [vmem:[%s2 + $0xb0] sm:$0xff]
  %v1995 = vld [vmem:[%s2 + $0xb8] sm:$0xff]
  %v1997 = vsel %vm314, %v1971, 0
  %1999 = vmatprep.subr.mxu0 %v1973
  %2000 = vmatpush1.msra.mxu0 %v1972
  %2001 = vmatprep.subr.mxu0 %v1975
  %2002 = vmatpush1.msra.mxu0 %v1974
  %2003 = vmatprep.subr.mxu0 %v1977
  %2004 = vmatpush1.msra.mxu0 %v1976
  %2005 = vmatprep.subr.mxu0 %v1979
  %2006 = vmatpush1.msra.mxu0 %v1978
  %2007 = vmatprep.subr.mxu0 %v1981
  %2008 = vmatpush1.msra.mxu0 %v1980
  %2009 = vmatprep.subr.mxu0 %v1983
  %2010 = vmatpush1.msra.mxu0 %v1982
  %2011 = vmatprep.subr.mxu0 %v1985
  %2012 = vmatpush1.msra.mxu0 %v1984
  %2013 = vmatprep.subr.mxu0 %v1987
  %2014 = vmatpush1.msra.mxu0 %v1986
  %2015 = vmatprep.subr.mxu0 %v1989
  %2016 = vmatpush1.msra.mxu0 %v1988
  %2017 = vmatprep.subr.mxu0 %v1991
  %2018 = vmatpush1.msra.mxu0 %v1990
  %2019 = vmatprep.subr.mxu0 %v1993
  %2020 = vmatpush1.msra.mxu0 %v1992
  %2021 = vmatprep.subr.mxu0 %v1995
  %2022 = vmatpush1.msra.mxu0 %v1994
  %2023 = vmatprep.subr.mxu0 0.0
  %2024 = vmatpush1.msra.mxu0 0.0
  %2025 = vmatprep.subr.mxu0 0.0
  %2026 = vmatpush1.msra.mxu0 0.0
  %2027 = vmatprep.subr.mxu0 0.0
  %2028 = vmatpush1.msra.mxu0 0.0
  %2029 = vmatprep.subr.mxu0 0.0
  %2030 = vmatpush1.msra.mxu0 0.0
  %2031 = vmatprep.subr.mxu0 0.0
  %2032 = vmatpush1.msra.mxu0 0.0
  %2033 = vmatprep.subr.mxu0 0.0
  %2034 = vmatpush1.msra.mxu0 0.0
  %2035 = vmatprep.subr.mxu0 0.0
  %2036 = vmatpush1.msra.mxu0 0.0
  %2037 = vmatprep.subr.mxu0 0.0
  %2038 = vmatpush1.msra.mxu0 0.0
  %2039 = vmatprep.subr.mxu0 0.0
  %2040 = vmatpush1.msra.mxu0 0.0
  %2041 = vmatprep.subr.mxu0 0.0
  %2042 = vmatpush1.msra.mxu0 0.0
  %2043 = vmatprep.subr.mxu0 0.0
  %2044 = vmatpush1.msra.mxu0 0.0
  %2045 = vmatprep.subr.mxu0 0.0
  %2046 = vmatpush1.msra.mxu0 0.0
  %2047 = vmatprep.subr.mxu0 0.0
  %2048 = vmatpush1.msra.mxu0 0.0
  %2049 = vmatprep.subr.mxu0 0.0
  %2050 = vmatpush1.msra.mxu0 0.0
  %2051 = vmatprep.subr.mxu0 0.0
  %2052 = vmatpush1.msra.mxu0 0.0
  %2053 = vmatprep.subr.mxu0 0.0
  %2054 = vmatpush1.msra.mxu0 0.0
  %2055 = vmatprep.subr.mxu0 0.0
  %2056 = vmatpush1.msra.mxu0 0.0
  %2057 = vmatprep.subr.mxu0 0.0
  %2058 = vmatpush1.msra.mxu0 0.0
  %2059 = vmatprep.subr.mxu0 0.0
  %2060 = vmatpush1.msra.mxu0 0.0
  %2061 = vmatprep.subr.mxu0 0.0
  %2062 = vmatpush1.msra.mxu0 0.0
  %2063 = vmatprep.mubr.f32.mxu0 0.0
  %2064 = vmatmul.mubr.f32.gmra.mrb[0].mxu0 %v1997
  %v2065 = vpop.f32.mrb[0].mxu0
  %v2066 = vadd.f32 %v175, %v2065
  %v2067 = vpop.f32.mrb[0].mxu0
  %v2068 = vadd.f32 %v179, %v2067
  %2069 = vdwg.mxu0
  %v2070 = vxor.u32 %v2066, 2147483648
  %v2071 = vxor.u32 %v2068, 2147483648
  %v2072 = vmul.f32 %v2070, 1.442695
  %v2073 = vpow.pop %v2072
  %v2074 = vmul.f32 %v2071, 1.442695
  %v2075 = vpow.pop %v2074
  %v2076 = vadd.f32 %v2073, 1.0
  %v2077 = vadd.f32 %v2075, 1.0
  %v2078 = vrcp.pop %v2076
  %v2079 = vmul.f32 1.0, %v2078
  %v2080 = vrcp.pop %v2077
  %v2081 = vmul.f32 1.0, %v2080
  %v2082 = vtanh.pop %v2068
  %v2083 = vmul.f32 %v2079, %v1853
  %2085 = vrot.lane.b32.xlu0 %v2082, 64
  %v2086 = vpop.permute.xlu0 %2085
  %v2088 = vmul.f32 %v2079, %v2086
  %2090 = vrot.lane.b32.xlu0 %v2088, 64
  %v2091 = vpop.permute.xlu0 %2090
  %v2093 = vadd.f32 %v2083, %v2091
  %v2094 = vtanh.pop %v2093
  %2096 = vrot.lane.b32.xlu0 %v2094, 64
  %v2097 = vpop.permute.xlu0 %2096
  %v2099 = vmul.f32 %v2081, %v2097
  %2100 = vst.msk [vmem:[#allocation3 + $0x38] sm:$0xff] %vm419, %v2099
  %v2101 = vld [vmem:[#allocation3] sm:$0xff]
  %v2102 = vld [vmem:[#allocation3 + $0x8] sm:$0xff]
  %v2103 = vld [vmem:[#allocation3 + $0x10] sm:$0xff]
  %v2104 = vld [vmem:[#allocation3 + $0x18] sm:$0xff]
  %v2105 = vld [vmem:[#allocation3 + $0x20] sm:$0xff]
  %v2106 = vld [vmem:[#allocation3 + $0x28] sm:$0xff]
  %v2107 = vld [vmem:[#allocation3 + $0x30] sm:$0xff]
  %v2108 = vld [vmem:[#allocation3 + $0x38] sm:$0xff]
  %v2109 = vld [vmem:[%s1 + $0x48] sm:$0xff]
  %v2110 = vld [vmem:[%s1 + $0x50] sm:$0xff]
  %v2111 = vld [vmem:[%s1 + $0x58] sm:$0xff]
  %v2112 = vld [vmem:[%s1 + $0x60] sm:$0xff]
  %v2113 = vld [vmem:[%s1 + $0x68] sm:$0xff]
  %v2114 = vld [vmem:[%s1 + $0x70] sm:$0xff]
  %v2115 = vld [vmem:[%s1 + $0x78] sm:$0xff]
  %v2116 = vld [vmem:[%s1 + $0x80] sm:$0xff]
  %v2117 = vld [vmem:[%s1 + $0x88] sm:$0x1]
  %v2118 = vlaneseq
  %v2119 = vshrl.u32 %v2118, 7
  %v2120 = vsub.s32 0, %v2119
  %v2121 = vrot.slane %v2117, %v2120
  %v2123 = vsel %vm419, %v2101, 0
  %v2126 = vsel %vm419, %v2102, 0
  %v2129 = vsel %vm419, %v2103, 0
  %v2132 = vsel %vm419, %v2104, 0
  %v2135 = vsel %vm419, %v2105, 0
  %v2138 = vsel %vm419, %v2106, 0
  %v2141 = vsel %vm419, %v2107, 0
  %v2144 = vsel %vm419, %v2108, 0
  %2146 = vmatprep.subr.mxu0 0.0
  %2147 = vmatpush1.msra.mxu0 %v2109
  %2148 = vmatprep.subr.mxu0 0.0
  %2149 = vmatpush1.msra.mxu0 %v2110
  %2150 = vmatprep.subr.mxu0 0.0
  %2151 = vmatpush1.msra.mxu0 %v2111
  %2152 = vmatprep.subr.mxu0 0.0
  %2153 = vmatpush1.msra.mxu0 %v2112
  %2154 = vmatprep.subr.mxu0 0.0
  %2155 = vmatpush1.msra.mxu0 %v2113
  %2156 = vmatprep.subr.mxu0 0.0
  %2157 = vmatpush1.msra.mxu0 %v2114
  %2158 = vmatprep.subr.mxu0 0.0
  %2159 = vmatpush1.msra.mxu0 %v2115
  %2160 = vmatprep.subr.mxu0 0.0
  %2161 = vmatpush1.msra.mxu0 %v2116
  %2162 = vmatprep.subr.mxu0 0.0
  %2163 = vmatpush1.msra.mxu0 0.0
  %2164 = vmatprep.subr.mxu0 0.0
  %2165 = vmatpush1.msra.mxu0 0.0
  %2166 = vmatprep.subr.mxu0 0.0
  %2167 = vmatpush1.msra.mxu0 0.0
  %2168 = vmatprep.subr.mxu0 0.0
  %2169 = vmatpush1.msra.mxu0 0.0
  %2170 = vmatprep.subr.mxu0 0.0
  %2171 = vmatpush1.msra.mxu0 0.0
  %2172 = vmatprep.subr.mxu0 0.0
  %2173 = vmatpush1.msra.mxu0 0.0
  %2174 = vmatprep.subr.mxu0 0.0
  %2175 = vmatpush1.msra.mxu0 0.0
  %2176 = vmatprep.subr.mxu0 0.0
  %2177 = vmatpush1.msra.mxu0 0.0
  %2178 = vmatprep.subr.mxu0 0.0
  %2179 = vmatpush1.msra.mxu0 0.0
  %2180 = vmatprep.subr.mxu0 0.0
  %2181 = vmatpush1.msra.mxu0 0.0
  %2182 = vmatprep.subr.mxu0 0.0
  %2183 = vmatpush1.msra.mxu0 0.0
  %2184 = vmatprep.subr.mxu0 0.0
  %2185 = vmatpush1.msra.mxu0 0.0
  %2186 = vmatprep.subr.mxu0 0.0
  %2187 = vmatpush1.msra.mxu0 0.0
  %2188 = vmatprep.subr.mxu0 0.0
  %2189 = vmatpush1.msra.mxu0 0.0
  %2190 = vmatprep.subr.mxu0 0.0
  %2191 = vmatpush1.msra.mxu0 0.0
  %2192 = vmatprep.subr.mxu0 0.0
  %2193 = vmatpush1.msra.mxu0 0.0
  %2194 = vmatprep.subr.mxu0 0.0
  %2195 = vmatpush1.msra.mxu0 0.0
  %2196 = vmatprep.subr.mxu0 0.0
  %2197 = vmatpush1.msra.mxu0 0.0
  %2198 = vmatprep.subr.mxu0 0.0
  %2199 = vmatpush1.msra.mxu0 0.0
  %2200 = vmatprep.subr.mxu0 0.0
  %2201 = vmatpush1.msra.mxu0 0.0
  %2202 = vmatprep.subr.mxu0 0.0
  %2203 = vmatpush1.msra.mxu0 0.0
  %2204 = vmatprep.subr.mxu0 0.0
  %2205 = vmatpush1.msra.mxu0 0.0
  %2206 = vmatprep.subr.mxu0 0.0
  %2207 = vmatpush1.msra.mxu0 0.0
  %2208 = vmatprep.subr.mxu0 0.0
  %2209 = vmatpush1.msra.mxu0 0.0
  %2210 = vmatprep.mubr.f32.mxu0 0.0
  %2211 = vmatmul.mubr.f32.gmra.mrb[0].mxu0 %v2123
  %v2212 = vpop.f32.mrb[0].mxu0
  %v2213 = vadd.f32 %v2121, %v2212
  %v2214 = vpop.f32.mrb[0].mxu0
  %2215 = vmatprep.mubr.f32.mxu0 0.0
  %2216 = vmatmul.mubr.f32.gmra.mrb[0].mxu0 %v2126
  %v2217 = vpop.f32.mrb[0].mxu0
  %v2218 = vadd.f32 %v2121, %v2217
  %v2219 = vpop.f32.mrb[0].mxu0
  %2220 = vmatprep.mubr.f32.mxu0 0.0
  %2221 = vmatmul.mubr.f32.gmra.mrb[0].mxu0 %v2129
  %v2222 = vpop.f32.mrb[0].mxu0
  %v2223 = vadd.f32 %v2121, %v2222
  %v2224 = vpop.f32.mrb[0].mxu0
  %2225 = vmatprep.mubr.f32.mxu0 0.0
  %2226 = vmatmul.mubr.f32.gmra.mrb[0].mxu0 %v2132
  %v2227 = vpop.f32.mrb[0].mxu0
  %v2228 = vadd.f32 %v2121, %v2227
  %v2229 = vpop.f32.mrb[0].mxu0
  %2230 = vmatprep.mubr.f32.mxu0 0.0
  %2231 = vmatmul.mubr.f32.gmra.mrb[0].mxu0 %v2135
  %v2232 = vpop.f32.mrb[0].mxu0
  %v2233 = vadd.f32 %v2121, %v2232
  %v2234 = vpop.f32.mrb[0].mxu0
  %2235 = vmatprep.mubr.f32.mxu0 0.0
  %2236 = vmatmul.mubr.f32.gmra.mrb[0].mxu0 %v2138
  %v2237 = vpop.f32.mrb[0].mxu0
  %v2238 = vadd.f32 %v2121, %v2237
  %v2239 = vpop.f32.mrb[0].mxu0
  %2240 = vmatprep.mubr.f32.mxu0 0.0
  %2241 = vmatmul.mubr.f32.gmra.mrb[0].mxu0 %v2141
  %v2242 = vpop.f32.mrb[0].mxu0
  %v2243 = vadd.f32 %v2121, %v2242
  %v2244 = vpop.f32.mrb[0].mxu0
  %2245 = vmatprep.mubr.f32.mxu0 0.0
  %2246 = vmatmul.mubr.f32.gmra.mrb[0].mxu0 %v2144
  %v2247 = vpop.f32.mrb[0].mxu0
  %v2248 = vadd.f32 %v2121, %v2247
  %v2249 = vpop.f32.mrb[0].mxu0
  %2250 = vdwg.mxu0
  %vm2251 = vcmask 7168
  %2252 = vst.msk [vmem:[%s3] sm:$0xff] %vm2251, %v2213
  %2253 = vst.msk [vmem:[%s3 + $0x8] sm:$0xff] %vm2251, %v2218
  %2254 = vst.msk [vmem:[%s3 + $0x10] sm:$0xff] %vm2251, %v2223
  %2255 = vst.msk [vmem:[%s3 + $0x18] sm:$0xff] %vm2251, %v2228
  %2256 = vst.msk [vmem:[%s3 + $0x20] sm:$0xff] %vm2251, %v2233
  %2257 = vst.msk [vmem:[%s3 + $0x28] sm:$0xff] %vm2251, %v2238
  %2258 = vst.msk [vmem:[%s3 + $0x30] sm:$0xff] %vm2251, %v2243
  %2259 = vst.msk [vmem:[%s3 + $0x38] sm:$0xff] %vm2251, %v2248
  // Predicated region
  $region14: #{decoder_rnn_forward.1} parent=0 // pred_check
    _
  $region15: #{decoder_rnn_forward.1} parent=0 // pred_check_branch
    %2261 = sbr.rel (0) target = $region17
  $region16: #{decoder_rnn_forward.1} parent=0 // pred_region
    _
  $region17: #{decoder_rnn_forward.1} parent=0 // pred_fallthru
    _
  // Predicated region
  $region18: #{decoder_rnn_forward.1} parent=0 // pred_check
    _
  $region19: #{decoder_rnn_forward.1} parent=0 // pred_check_branch
    %2263 = sbr.rel (0) target = $region21
  $region20: #{decoder_rnn_forward.1} parent=0 // pred_region
    _
  $region21: #{decoder_rnn_forward.1} parent=0 // pred_fallthru
    _

</llo_original>
